<compile_context>
chip_gen: v6e
topology: v6e:2x2x1
jax: 0.10.0
libtpu: 0.0.40
codegen_flags: <defaults>
</compile_context>

<pallas_src>
import math

import jax
import jax.numpy as jnp
from jax.experimental import pallas as pl
from jax.experimental.pallas import tpu as pltpu


def _round_up(v, m):
    return (v + m - 1) // m * m


def _nonlocal_kernel(x_ref, phit_ref, g_ref,
                     wt_ref, bt_ref,      # theta : (Cp, ICp) bf16, (1, ICp) f32
                     ww_ref, bw_ref,      # W (+ folded BN): (ICp, Cp) bf16, (1, Cp) f32
                     o_ref):
    mxu = wt_ref.dtype
    f32 = jnp.float32

    x_q = x_ref[...]                                              # (TQ, Cp)
    theta = jnp.dot(x_q.astype(mxu), wt_ref[...],
                    preferred_element_type=f32) + bt_ref[...]     # (TQ, ICp)

    # logits against the pre-transposed pooled-phi cache -> plain MXU dot.
    logits = jnp.dot(theta.astype(mxu), phit_ref[...],
                     preferred_element_type=f32)                  # (TQ, Np)
    logits = logits - jnp.max(logits, axis=-1, keepdims=True)
    p = jnp.exp(logits)                                           # f32 softmax
    f = p * pl.reciprocal(jnp.sum(p, axis=-1, keepdims=True), approx=True)

    y = jnp.dot(f.astype(mxu), g_ref[...],
                preferred_element_type=f32)                       # (TQ, ICp)
    w_out = jnp.dot(y.astype(mxu), ww_ref[...],
                    preferred_element_type=f32) + bw_ref[...]     # (TQ, Cp)
    o_ref[...] = (w_out + x_q.astype(f32)).astype(o_ref.dtype)


def nonlocal_block_pallas(x_nchw, params, *, tq=None):
    B, C, H, W = x_nchw.shape
    IC = params["w_theta"].shape[0]
    assert H % 2 == 0 and W % 2 == 0, "MaxPool2d(2) sub_sample path needs even H, W"
    # TODO(synk): odd H/W would need PyTorch's floor-pooling (drop last row/col).
    N = H * W
    Np = (H // 2) * (W // 2)
    Cp = _round_up(C, 128)          # lane-dense channel dims
    ICp = _round_up(IC, 128)

    # Query tile: keep the MXU M-dim >= 256 when possible; pad N up to a tile
    # multiple rather than shrinking the tile (padded query rows are discarded).
    if tq is None:
        if N >= 512 and N % 512 == 0:
            tq = 512
        elif N >= 256:
            tq = 256
        else:
            tq = _round_up(N, 8)
    Npad = _round_up(N, tq)

    f32, bf16 = jnp.float32, jnp.bfloat16

    # ------------- layout glue + pooled phi/g precompute (plain XLA) -------------
    x_nhwc = jnp.transpose(x_nchw, (0, 2, 3, 1))                  # (B, H, W, C)
    x_flat = x_nhwc.reshape(B, N, C)
    if Cp != C or Npad != N:
        x_flat = jnp.pad(x_flat, ((0, 0), (0, Npad - N), (0, Cp - C)))

    def pooled_proj(w, b):
        # 1x1 conv (bf16 operands, f32 accum) + bias + MaxPool2d(2) -> (B, Np, IC)
        p = jnp.einsum("bhwc,ic->bhwi", x_nhwc.astype(bf16), w.astype(bf16),
                       preferred_element_type=f32) + b.astype(f32)
        p = p.reshape(B, H // 2, 2, W // 2, 2, IC).max(axis=(2, 4))
        return p.reshape(B, Np, IC)

    def pad_last(a, c):
        if c == a.shape[-1]:
            return a
        return jnp.pad(a, ((0, 0), (0, 0), (0, c - a.shape[-1])))

    phi_t = jnp.transpose(
        pad_last(pooled_proj(params["w_phi"], params["b_phi"]), ICp),
        (0, 2, 1)).astype(bf16)                                   # (B, ICp, Np)
    g_pre = pad_last(pooled_proj(params["w_g"], params["b_g"]),
                     ICp).astype(bf16)                            # (B, Np, ICp)

    # Fold inference-mode BatchNorm into the final 1x1 "W" conv.
    # TODO(synk): training-mode BatchNorm (batch statistics of y) is not implemented.
    eps = 1e-5
    scale = params["bn_gamma"] / jnp.sqrt(params["bn_var"] + eps)
    w_w_eff = params["w_w"] * scale[:, None]                      # (C, IC)
    b_w_eff = scale * (params["b_w"] - params["bn_mean"]) + params["bn_beta"]

    def pad_w(w, r, c):     # zero-pad to (r, c), bf16 for the MXU
        return jnp.pad(w, ((0, r - w.shape[0]), (0, c - w.shape[1]))).astype(bf16)

    def pad_b(b, c):        # zero-pad to (1, c), f32 (added after f32 accumulation)
        return jnp.pad(b, (0, c - b.shape[0])).reshape(1, c).astype(f32)

    wt = pad_w(params["w_theta"].T, Cp, ICp)
    ww = pad_w(w_w_eff.T, ICp, Cp)
    bt = pad_b(params["b_theta"], ICp)
    bw = pad_b(b_w_eff, Cp)

    # ------------------- chip-aware VMEM budget + cost estimate -------------------
    oi = jnp.dtype(x_nchw.dtype).itemsize
    est = (2 * tq * Cp * x_flat.dtype.itemsize          # x query tile (double-buffered)
           + 2 * ICp * Np * 2 + 2 * Np * ICp * 2        # phi^T / g (bf16, db)
           + 2 * tq * Cp * oi                           # output tile (db)
           + 2 * (2 * Cp * ICp * 2 + (ICp + Cp) * 4)    # wt/ww + bt/bw (db)
           + tq * Np * 4                                # logits / softmax working set
           + 4 * tq * max(ICp, Cp) * 4)                 # theta / y / w_out temporaries
    try:
        vmem_cap = pltpu.get_tpu_info().vmem_capacity_bytes
    except Exception:                                    # conservative fallback (v7x)
        vmem_cap = 64 * 1024 * 1024
    vmem_limit = int(min(max(est * 3 // 2, 32 * 1024 * 1024), vmem_cap * 3 // 4))

    matmul_flops = 2 * B * Npad * (Cp * ICp + ICp * Np + Np * ICp + ICp * Cp)
    bytes_accessed = (int(x_flat.size) * x_flat.dtype.itemsize
                      + int(phi_t.size) * 2 + int(g_pre.size) * 2
                      + (int(wt.size) + int(ww.size)) * 2
                      + (int(bt.size) + int(bw.size)) * 4
                      + B * Npad * Cp * oi)
    cost = pl.CostEstimate(flops=int(matmul_flops),
                           transcendentals=int(B * Npad * (Np + 1)),
                           bytes_accessed=int(bytes_accessed))

    qmap = lambda b, q: (b, q, 0)          # per-(batch, query-tile) blocks
    bmap = lambda b, q: (b, 0, 0)          # per-batch resident blocks (phi^T, g)
    cmap = lambda b, q: (0, 0)             # constant weight / bias blocks
    # NOTE: the weight / phi^T / g blocks are (near-)constant; pipeline_mode=
    # pl.Buffered(1) would halve their VMEM footprint on v7x if needed.

    out = pl.pallas_call(
        _nonlocal_kernel,
        out_shape=jax.ShapeDtypeStruct((B, Npad, Cp), x_nchw.dtype),
        grid=(B, Npad // tq),
        in_specs=[
            pl.BlockSpec((None, tq, Cp), qmap),          # x query tile
            pl.BlockSpec((None, ICp, Np), bmap),         # pooled phi^T
            pl.BlockSpec((None, Np, ICp), bmap),         # pooled g
            pl.BlockSpec((Cp, ICp), cmap), pl.BlockSpec((1, ICp), cmap),   # theta W,b
            pl.BlockSpec((ICp, Cp), cmap), pl.BlockSpec((1, Cp), cmap),    # W(+BN) W,b
        ],
        out_specs=pl.BlockSpec((None, tq, Cp), qmap),
        compiler_params=pltpu.CompilerParams(
            dimension_semantics=("parallel", "parallel"),
            vmem_limit_bytes=vmem_limit,
        ),
        cost_estimate=cost,
    )(x_flat, phi_t, g_pre, wt, bt, ww, bw)

    if Npad != N or Cp != C:
        out = out[:, :N, :C]
    out = out.reshape(B, H, W, C)
    return jnp.transpose(out, (0, 3, 1, 2))               # back to NCHW


def _reference(x_nchw, params, mxu_dtype=jnp.float32):
    """Pure-JAX mirror of the PyTorch forward (inference-mode BN).

    `mxu_dtype` mirrors the kernel's precision policy: matmul/conv operands are
    cast to it while accumulation stays float32 (float32 -> exact PyTorch mirror,
    bfloat16 -> numerics-matched to the kernel).
    """
    B, C, H, W = x_nchw.shape
    IC = params["w_theta"].shape[0]
    f32 = jnp.float32
    hi = jax.lax.Precision.HIGHEST
    cast = lambda a: a.astype(mxu_dtype)

    def conv1x1(x, w, b):
        y = jnp.einsum('bchw,oc->bohw', cast(x), cast(w),
                       precision=hi, preferred_element_type=f32)
        return y + b[None, :, None, None].astype(f32)

    def maxpool2(t):
        b_, o_, h_, w_ = t.shape
        return t.reshape(b_, o_, h_ // 2, 2, w_ // 2, 2).max(axis=(3, 5))

    g_x = maxpool2(conv1x1(x_nchw, params["w_g"], params["b_g"]))
    g_x = g_x.reshape(B, IC, -1).transpose(0, 2, 1)
    theta = conv1x1(x_nchw, params["w_theta"], params["b_theta"])
    theta = theta.reshape(B, IC, -1).transpose(0, 2, 1)
    phi = maxpool2(conv1x1(x_nchw, params["w_phi"], params["b_phi"]))
    phi = phi.reshape(B, IC, -1)
    f = jax.nn.softmax(
        jnp.einsum('bnc,bcm->bnm', cast(theta), cast(phi),
                   precision=hi, preferred_element_type=f32), axis=-1)
    y = jnp.einsum('bnm,bmc->bnc', cast(f), cast(g_x),
                   precision=hi, preferred_element_type=f32)
    y = y.transpose(0, 2, 1).reshape(B, IC, H, W)
    y = conv1x1(y, params["w_w"], params["b_w"])
    scale = params["bn_gamma"] / jnp.sqrt(params["bn_var"] + 1e-5)
    y = (scale[None, :, None, None] * (y - params["bn_mean"][None, :, None, None])
         + params["bn_beta"][None, :, None, None])
    return y + x_nchw


if __name__ == "__main__":
    B, C, H, W = 2, 4, 16, 16
    IC = max(C // 2, 1)

    key = jax.random.PRNGKey(0)
    keys = jax.random.split(key, 12)
    x = jax.random.normal(keys[0], (B, C, H, W), jnp.float32)

    # NOTE: PyTorch's __init__ zero-inits the W conv + BN (so z == x).  We use
    # nonzero weights so the attention path is exercised; they are 0.5x the
    # module's He-init std so softmax logits stay moderate and the bf16-operand
    # kernel can also be checked against the exact f32 reference.
    std = 0.5 * math.sqrt(2.0 / IC)       # n = 1*1*out_channels for g/theta/phi
    std_w = 0.5 * math.sqrt(2.0 / C)      # n = 1*1*out_channels for the W conv
    params = dict(
        w_theta=std * jax.random.normal(keys[1], (IC, C), jnp.float32),
        b_theta=0.05 * jax.random.normal(keys[2], (IC,), jnp.float32),
        w_phi=std * jax.random.normal(keys[3], (IC, C), jnp.float32),
        b_phi=0.05 * jax.random.normal(keys[4], (IC,), jnp.float32),
        w_g=std * jax.random.normal(keys[5], (IC, C), jnp.float32),
        b_g=0.05 * jax.random.normal(keys[6], (IC,), jnp.float32),
        w_w=std_w * jax.random.normal(keys[7], (C, IC), jnp.float32),
        b_w=0.05 * jax.random.normal(keys[8], (C,), jnp.float32),
        bn_gamma=1.0 + 0.1 * jax.random.normal(keys[9], (C,), jnp.float32),
        bn_beta=0.1 * jax.random.normal(keys[10], (C,), jnp.float32),
        bn_mean=0.1 * jax.random.normal(keys[11], (C,), jnp.float32),
        bn_var=jnp.ones((C,), jnp.float32),
    )

    z = jax.block_until_ready(nonlocal_block_pallas(x, params))
    assert z.shape == x.shape

    # Tight check vs a numerics-matched reference (same bf16-operand / f32-accum
    # policy as the kernel); catches any structural / fusion bug.
    z_bf16 = _reference(x, params, mxu_dtype=jnp.bfloat16)
    assert jnp.allclose(z, z_bf16, atol=1e-2, rtol=1e-2), \
        float(jnp.max(jnp.abs(z - z_bf16)))

    # Looser check vs the exact f32 PyTorch-equivalent forward (bf16 operand
    # rounding is mildly amplified through the softmax).
    z_f32 = _reference(x, params)
    assert jnp.allclose(z, z_f32, atol=7e-2, rtol=5e-2), \
        float(jnp.max(jnp.abs(z - z_f32)))

    print("KERNEL_OK")
</pallas_src>

<mosaic_0001>
module attributes {stable_mosaic.version = 11 : i64} {
  func.func @_nonlocal_kernel(%arg0: i32, %arg1: i32, %arg2: memref<1x256x128xf32, #tpu.memory_space<vmem>>, %arg3: memref<1x128x64xbf16, #tpu.memory_space<vmem>>, %arg4: memref<1x64x128xbf16, #tpu.memory_space<vmem>>, %arg5: memref<128x128xbf16, #tpu.memory_space<vmem>>, %arg6: memref<1x128xf32, #tpu.memory_space<vmem>>, %arg7: memref<128x128xbf16, #tpu.memory_space<vmem>>, %arg8: memref<1x128xf32, #tpu.memory_space<vmem>>, %arg9: memref<1x256x128xf32, #tpu.memory_space<vmem>>) attributes {dimension_semantics = [#tpu.dimension_semantics<parallel>, #tpu.dimension_semantics<parallel>], iteration_bounds = array<i64: 2, 1>, scalar_prefetch = 0 : i64, scratch_operands = 0 : i64, tpu.core_type = #tpu.core_type<tc>, window_params = [{transform_indices = @transform_0, window_bounds = array<i64: 1, 256, 128>}, {transform_indices = @transform_1, window_bounds = array<i64: 1, 128, 64>}, {transform_indices = @transform_2, window_bounds = array<i64: 1, 64, 128>}, {pipeline_mode = #tpu.pipeline_mode<synchronous>, transform_indices = @transform_3, window_bounds = array<i64: 128, 128>}, {pipeline_mode = #tpu.pipeline_mode<synchronous>, transform_indices = @transform_4, window_bounds = array<i64: 1, 128>}, {pipeline_mode = #tpu.pipeline_mode<synchronous>, transform_indices = @transform_5, window_bounds = array<i64: 128, 128>}, {pipeline_mode = #tpu.pipeline_mode<synchronous>, transform_indices = @transform_6, window_bounds = array<i64: 1, 128>}, {transform_indices = @transform_7, window_bounds = array<i64: 1, 256, 128>}]} {
    %c0 = arith.constant 0 : index
    %c0_0 = arith.constant 0 : index
    %c0_1 = arith.constant 0 : index
    %0 = vector.load %arg2[%c0, %c0_0, %c0_1] : memref<1x256x128xf32, #tpu.memory_space<vmem>>, vector<1x256x128xf32>
    %1 = vector.shape_cast %0 : vector<1x256x128xf32> to vector<256x128xf32>
    %2 = arith.truncf %1 : vector<256x128xf32> to vector<256x128xbf16>
    %c0_2 = arith.constant 0 : index
    %c0_3 = arith.constant 0 : index
    %3 = vector.load %arg5[%c0_2, %c0_3] : memref<128x128xbf16, #tpu.memory_space<vmem>>, vector<128x128xbf16>
    %cst = arith.constant dense<0.000000e+00> : vector<256x128xf32>
    %4 = tpu.matmul %2, %3, %cst {dimension_numbers = #tpu.dot_dimension_numbers<[1], [0], [0], [1], [0, 0, 1, 1], [], []>} : vector<256x128xbf16>, vector<128x128xbf16>, vector<256x128xf32> -> vector<256x128xf32>
    %c0_4 = arith.constant 0 : index
    %c0_5 = arith.constant 0 : index
    %5 = vector.load %arg6[%c0_4, %c0_5] : memref<1x128xf32, #tpu.memory_space<vmem>>, vector<1x128xf32>
    %6 = vector.broadcast %5 : vector<1x128xf32> to vector<256x128xf32>
    %7 = arith.addf %4, %6 : vector<256x128xf32>
    %8 = arith.truncf %7 : vector<256x128xf32> to vector<256x128xbf16>
    %c0_6 = arith.constant 0 : index
    %c0_7 = arith.constant 0 : index
    %c0_8 = arith.constant 0 : index
    %9 = vector.load %arg3[%c0_6, %c0_7, %c0_8] : memref<1x128x64xbf16, #tpu.memory_space<vmem>>, vector<1x128x64xbf16>
    %10 = vector.shape_cast %9 : vector<1x128x64xbf16> to vector<128x64xbf16>
    %cst_9 = arith.constant dense<0.000000e+00> : vector<256x64xf32>
    %11 = tpu.matmul %8, %10, %cst_9 {dimension_numbers = #tpu.dot_dimension_numbers<[1], [0], [0], [1], [0, 0, 1, 1], [], []>} : vector<256x128xbf16>, vector<128x64xbf16>, vector<256x64xf32> -> vector<256x64xf32>
    %cst_10 = arith.constant dense<0xFF800000> : vector<256xf32>
    %12 = vector.multi_reduction <maximumf>, %11, %cst_10 [1] : vector<256x64xf32> to vector<256xf32>
    %13 = vector.shape_cast %12 : vector<256xf32> to vector<256x1xf32>
    %14 = vector.broadcast %13 : vector<256x1xf32> to vector<256x64xf32>
    %15 = arith.subf %11, %14 : vector<256x64xf32>
    %16 = math.exp %15 : vector<256x64xf32>
    %cst_11 = arith.constant dense<0.000000e+00> : vector<256xf32>
    %17 = vector.multi_reduction <add>, %16, %cst_11 [1] : vector<256x64xf32> to vector<256xf32>
    %18 = vector.shape_cast %17 : vector<256xf32> to vector<256x1xf32>
    %19 = tpu.reciprocal %18 {approx = true} : vector<256x1xf32> -> vector<256x1xf32>
    %20 = vector.broadcast %19 : vector<256x1xf32> to vector<256x64xf32>
    %21 = arith.mulf %16, %20 : vector<256x64xf32>
    %22 = arith.truncf %21 : vector<256x64xf32> to vector<256x64xbf16>
    %c0_12 = arith.constant 0 : index
    %c0_13 = arith.constant 0 : index
    %c0_14 = arith.constant 0 : index
    %23 = vector.load %arg4[%c0_12, %c0_13, %c0_14] : memref<1x64x128xbf16, #tpu.memory_space<vmem>>, vector<1x64x128xbf16>
    %24 = vector.shape_cast %23 : vector<1x64x128xbf16> to vector<64x128xbf16>
    %cst_15 = arith.constant dense<0.000000e+00> : vector<256x128xf32>
    %25 = tpu.matmul %22, %24, %cst_15 {dimension_numbers = #tpu.dot_dimension_numbers<[1], [0], [0], [1], [0, 0, 1, 1], [], []>} : vector<256x64xbf16>, vector<64x128xbf16>, vector<256x128xf32> -> vector<256x128xf32>
    %26 = arith.truncf %25 : vector<256x128xf32> to vector<256x128xbf16>
    %c0_16 = arith.constant 0 : index
    %c0_17 = arith.constant 0 : index
    %27 = vector.load %arg7[%c0_16, %c0_17] : memref<128x128xbf16, #tpu.memory_space<vmem>>, vector<128x128xbf16>
    %cst_18 = arith.constant dense<0.000000e+00> : vector<256x128xf32>
    %28 = tpu.matmul %26, %27, %cst_18 {dimension_numbers = #tpu.dot_dimension_numbers<[1], [0], [0], [1], [0, 0, 1, 1], [], []>} : vector<256x128xbf16>, vector<128x128xbf16>, vector<256x128xf32> -> vector<256x128xf32>
    %c0_19 = arith.constant 0 : index
    %c0_20 = arith.constant 0 : index
    %29 = vector.load %arg8[%c0_19, %c0_20] : memref<1x128xf32, #tpu.memory_space<vmem>>, vector<1x128xf32>
    %30 = vector.broadcast %29 : vector<1x128xf32> to vector<256x128xf32>
    %31 = arith.addf %28, %30 : vector<256x128xf32>
    %32 = arith.addf %31, %1 : vector<256x128xf32>
    %c0_21 = arith.constant 0 : index
    %c0_22 = arith.constant 0 : index
    %c0_23 = arith.constant 0 : index
    %33 = vector.load %arg9[%c0_21, %c0_22, %c0_23] : memref<1x256x128xf32, #tpu.memory_space<vmem>>, vector<1x256x128xf32>
    %34 = vector.shape_cast %33 : vector<1x256x128xf32> to vector<256x128xf32>
    %35 = vector.shape_cast %32 : vector<256x128xf32> to vector<1x256x128xf32>
    tpu.vector_store %arg9[%c0_21, %c0_22, %c0_23], %35 {strides = array<i32>} : memref<1x256x128xf32, #tpu.memory_space<vmem>>, vector<1x256x128xf32>,
    return
  }
  func.func @transform_0(%arg0: i32, %arg1: i32) -> (i32, i32, i32) {
    %c0_i32 = arith.constant 0 : i32
    %c0_i32_0 = arith.constant 0 : i32
    return %arg0, %arg1, %c0_i32 : i32, i32, i32
  }
  func.func @transform_1(%arg0: i32, %arg1: i32) -> (i32, i32, i32) {
    %c0_i32 = arith.constant 0 : i32
    %c0_i32_0 = arith.constant 0 : i32
    %c0_i32_1 = arith.constant 0 : i32
    return %arg0, %c0_i32, %c0_i32_0 : i32, i32, i32
  }
  func.func @transform_2(%arg0: i32, %arg1: i32) -> (i32, i32, i32) {
    %c0_i32 = arith.constant 0 : i32
    %c0_i32_0 = arith.constant 0 : i32
    %c0_i32_1 = arith.constant 0 : i32
    return %arg0, %c0_i32, %c0_i32_0 : i32, i32, i32
  }
  func.func @transform_3(%arg0: i32, %arg1: i32) -> (i32, i32) {
    %c0_i32 = arith.constant 0 : i32
    %c0_i32_0 = arith.constant 0 : i32
    %c0_i32_1 = arith.constant 0 : i32
    return %c0_i32, %c0_i32_0 : i32, i32
  }
  func.func @transform_4(%arg0: i32, %arg1: i32) -> (i32, i32) {
    %c0_i32 = arith.constant 0 : i32
    %c0_i32_0 = arith.constant 0 : i32
    %c0_i32_1 = arith.constant 0 : i32
    return %c0_i32, %c0_i32_0 : i32, i32
  }
  func.func @transform_5(%arg0: i32, %arg1: i32) -> (i32, i32) {
    %c0_i32 = arith.constant 0 : i32
    %c0_i32_0 = arith.constant 0 : i32
    %c0_i32_1 = arith.constant 0 : i32
    return %c0_i32, %c0_i32_0 : i32, i32
  }
  func.func @transform_6(%arg0: i32, %arg1: i32) -> (i32, i32) {
    %c0_i32 = arith.constant 0 : i32
    %c0_i32_0 = arith.constant 0 : i32
    %c0_i32_1 = arith.constant 0 : i32
    return %c0_i32, %c0_i32_0 : i32, i32
  }
  func.func @transform_7(%arg0: i32, %arg1: i32) -> (i32, i32, i32) {
    %c0_i32 = arith.constant 0 : i32
    %c0_i32_0 = arith.constant 0 : i32
    return %arg0, %arg1, %c0_i32 : i32, i32, i32
  }
}

</mosaic_0001>

<llo_original>
// kernel: tpu_custom_call.1
$region0: #{tpu_custom_call.1}
  #allocation0 [shape = 'u32[]', space=smem, size = 0x4, offset = 0x4, fixed_abs, tag = 'smem constant byte address 0x4 - core index']
  #allocation1 [shape = 'u32[144,128]{1,0:T(1,128)}', space=vmem, size = 0x12000, scoped, tag = 'internal scratch']
  %s0 = inlined_call_operand.hbm [shape: f32[2,256,128], index: 0, kind: input, shape index: {}]
  %s1 = inlined_call_operand.vmem [shape: bf16[2,128,64], index: 1, kind: input, shape index: {}]
  %s2 = inlined_call_operand.vmem [shape: bf16[2,64,128], index: 2, kind: input, shape index: {}]
  %s3 = inlined_call_operand.vmem [shape: bf16[128,128], index: 3, kind: input, shape index: {}]
  %s4 = inlined_call_operand.vmem [shape: f32[1,128], index: 4, kind: input, shape index: {}]
  %s5 = inlined_call_operand.vmem [shape: bf16[128,128], index: 5, kind: input, shape index: {}]
  %s6 = inlined_call_operand.vmem [shape: f32[1,128], index: 6, kind: input, shape index: {}]
  %s7 = inlined_call_operand.hbm [shape: f32[2,256,128], index: 7, kind: output, shape index: {}]
  %s8 = sld [smem:[#allocation0]]
  $region65: #{tpu_custom_call.1} parent=0
    _
  %s10 = ssub.s32 1, %s8
  %s11 = scalar_select 0, %s10, %s8
  $region1: #{tpu_custom_call.1} parent=0
    #allocation2 [shape = 'u8[262144]{0}', space=vmem, size = 0x40000, scoped, tag = 'input window, operand 0']
    #allocation3 [shape = 's32[2]{0}', space=sflag, size = 0x8, scoped, tag = 'scoped memory for tpu_custom_call.1']
    #allocation4 [shape = 's32[2]{0}', space=sflag, size = 0x8, scoped, tag = 'scoped memory for tpu_custom_call.1']
    #allocation5 [shape = 'u8[262144]{0}', space=vmem, size = 0x40000, scoped, tag = 'output window, operand 0']
    %12 = vsyncpa [#allocation3], 0
    %s13 = scalar_lea.sflag [#allocation3], 1
    %14 = vsyncpa %s13, 0
    %15 = vsyncpa [#allocation4], 0
    %s16 = scalar_lea.sflag [#allocation4], 1
    %17 = vsyncpa %s16, 0
    loop: start=0, step=1, limit=4
    $region2: #{tpu_custom_call.1} parent=1 // loop_pre_header
      _
    $region3: #{tpu_custom_call.1} parent=1 // loop_header
      %s19 = sphi 0, %s23
      %p20 = scmp.ge.s32.totalorder %s19, 4
      %s26 = sphi 0, %s38
      %s27 = sphi 0, %s34
      %s28 = sphi 0, %s26
      %s29 = sphi 0, %s27
      %s30 = sphi 0, %s28
      %s31 = sphi 0, %s29
      %s43 = sphi 0, %s45
      %s46 = sphi 0, %s43
      %s47 = sphi 0, %s46
      %s63 = sphi 0, %s47
      %s69 = sphi 0, %s71
      %s72 = sphi 0, %s69
      %s73 = sphi 0, %s72
      %s89 = sphi 0, %s73
      %s95 = sphi 0, %s97
      %s98 = sphi 0, %s95
      %s99 = sphi 0, %s98
      %s115 = sphi 0, %s99
      %s119 = sphi 0, %s119
      %s121 = sphi 0, %s119
      %s122 = sphi 0, %s121
      %s136 = sphi 0, %s122
      %s140 = sphi 0, %s140
      %s142 = sphi 0, %s140
      %s143 = sphi 0, %s142
      %s157 = sphi 0, %s143
      %s161 = sphi 0, %s161
      %s163 = sphi 0, %s161
      %s164 = sphi 0, %s163
      %s178 = sphi 0, %s164
      %s182 = sphi 0, %s182
      %s184 = sphi 0, %s182
      %s185 = sphi 0, %s184
      %s199 = sphi 0, %s185
      %s207 = sphi 0, %s209
      %s210 = sphi 0, %s207
      %s211 = sphi 0, %s210
      %s227 = sphi 0, %s211
    $region4: #{tpu_custom_call.1} parent=1 // loop_header_branch
      %22 = sbr.rel (%p20) target = $region8
    $region5: #{tpu_custom_call.1} parent=1 // loop_body
      %s24 = ssub.s32 %s19, 1
      %s25 = ssub.s32 %s19, 2
      %s32 = sadd.s32 1, %s27
      %p33 = scmp.ge.s32.totalorder %s32, 1
      %s34 = scalar_select %p33, 0, %s32
      %s35 = sadd.s32 1, %s26
      %s36 = scalar_select %p33, %s35, %s26
      %p37 = scmp.ge.s32.totalorder %s36, 2
      %s38 = scalar_select %p37, 0, %s36
      %s39 = ssub.s32 %s26, %s38
      %s40 = ssub.s32 %s27, %s34
      %s41 = sor.u32 %s39, %s40
      %p42 = scmp.eq.s32.totalorder %s41, 0
      %s44 = sadd.s32 %s43, 1
      %s45 = scalar_select %p42, %s43, %s44
      %p48 = pneg %p42
      %p49 = scmp.eq.s32.totalorder %s19, 1
      %p50 = por %p48, %p49
      %p51 = scmp.ne.s32.totalorder %s43, %s46
      %p52 = scmp.eq.s32.totalorder %s19, 0
      %p53 = por %p51, %p52
      %p54 = scmp.ne.s32.totalorder %s43, %s46
      %p55 = scmp.eq.s32.totalorder %s24, 1
      %p56 = por %p54, %p55
      %p57 = scmp.ne.s32.totalorder %s46, %s47
      %p58 = scmp.eq.s32.totalorder %s24, 0
      %p59 = por %p57, %p58
      %p60 = scmp.ne.s32.totalorder %s46, %s47
      %p61 = scmp.eq.s32.totalorder %s25, 1
      %p62 = por %p60, %p61
      %p64 = scmp.ne.s32.totalorder %s47, %s63
      %p65 = scmp.eq.s32.totalorder %s25, 0
      %p66 = por %p64, %p65
      %s67 = ssub.s32 %s26, %s38
      %p68 = scmp.eq.s32.totalorder %s67, 0
      %s70 = sadd.s32 %s69, 1
      %s71 = scalar_select %p68, %s69, %s70
      %p74 = pneg %p68
      %p75 = scmp.eq.s32.totalorder %s19, 1
      %p76 = por %p74, %p75
      %p77 = scmp.ne.s32.totalorder %s69, %s72
      %p78 = scmp.eq.s32.totalorder %s19, 0
      %p79 = por %p77, %p78
      %p80 = scmp.ne.s32.totalorder %s69, %s72
      %p81 = scmp.eq.s32.totalorder %s24, 1
      %p82 = por %p80, %p81
      %p83 = scmp.ne.s32.totalorder %s72, %s73
      %p84 = scmp.eq.s32.totalorder %s24, 0
      %p85 = por %p83, %p84
      %p86 = scmp.ne.s32.totalorder %s72, %s73
      %p87 = scmp.eq.s32.totalorder %s25, 1
      %p88 = por %p86, %p87
      %p90 = scmp.ne.s32.totalorder %s73, %s89
      %p91 = scmp.eq.s32.totalorder %s25, 0
      %p92 = por %p90, %p91
      %s93 = ssub.s32 %s26, %s38
      %p94 = scmp.eq.s32.totalorder %s93, 0
      %s96 = sadd.s32 %s95, 1
      %s97 = scalar_select %p94, %s95, %s96
      %p100 = pneg %p94
      %p101 = scmp.eq.s32.totalorder %s19, 1
      %p102 = por %p100, %p101
      %p103 = scmp.ne.s32.totalorder %s95, %s98
      %p104 = scmp.eq.s32.totalorder %s19, 0
      %p105 = por %p103, %p104
      %p106 = scmp.ne.s32.totalorder %s95, %s98
      %p107 = scmp.eq.s32.totalorder %s24, 1
      %p108 = por %p106, %p107
      %p109 = scmp.ne.s32.totalorder %s98, %s99
      %p110 = scmp.eq.s32.totalorder %s24, 0
      %p111 = por %p109, %p110
      %p112 = scmp.ne.s32.totalorder %s98, %s99
      %p113 = scmp.eq.s32.totalorder %s25, 1
      %p114 = por %p112, %p113
      %p116 = scmp.ne.s32.totalorder %s99, %s115
      %p117 = scmp.eq.s32.totalorder %s25, 0
      %p118 = por %p116, %p117
      %s120 = sadd.s32 %s119, 1
      %p123 = scmp.eq.s32.totalorder %s19, 1
      %p124 = scmp.ne.s32.totalorder %s119, %s121
      %p125 = scmp.eq.s32.totalorder %s19, 0
      %p126 = por %p124, %p125
      %p127 = scmp.ne.s32.totalorder %s119, %s121
      %p128 = scmp.eq.s32.totalorder %s24, 1
      %p129 = por %p127, %p128
      %p130 = scmp.ne.s32.totalorder %s121, %s122
      %p131 = scmp.eq.s32.totalorder %s24, 0
      %p132 = por %p130, %p131
      %p133 = scmp.ne.s32.totalorder %s121, %s122
      %p134 = scmp.eq.s32.totalorder %s25, 1
      %p135 = por %p133, %p134
      %p137 = scmp.ne.s32.totalorder %s122, %s136
      %p138 = scmp.eq.s32.totalorder %s25, 0
      %p139 = por %p137, %p138
      %s141 = sadd.s32 %s140, 1
      %p144 = scmp.eq.s32.totalorder %s19, 1
      %p145 = scmp.ne.s32.totalorder %s140, %s142
      %p146 = scmp.eq.s32.totalorder %s19, 0
      %p147 = por %p145, %p146
      %p148 = scmp.ne.s32.totalorder %s140, %s142
      %p149 = scmp.eq.s32.totalorder %s24, 1
      %p150 = por %p148, %p149
      %p151 = scmp.ne.s32.totalorder %s142, %s143
      %p152 = scmp.eq.s32.totalorder %s24, 0
      %p153 = por %p151, %p152
      %p154 = scmp.ne.s32.totalorder %s142, %s143
      %p155 = scmp.eq.s32.totalorder %s25, 1
      %p156 = por %p154, %p155
      %p158 = scmp.ne.s32.totalorder %s143, %s157
      %p159 = scmp.eq.s32.totalorder %s25, 0
      %p160 = por %p158, %p159
      %s162 = sadd.s32 %s161, 1
      %p165 = scmp.eq.s32.totalorder %s19, 1
      %p166 = scmp.ne.s32.totalorder %s161, %s163
      %p167 = scmp.eq.s32.totalorder %s19, 0
      %p168 = por %p166, %p167
      %p169 = scmp.ne.s32.totalorder %s161, %s163
      %p170 = scmp.eq.s32.totalorder %s24, 1
      %p171 = por %p169, %p170
      %p172 = scmp.ne.s32.totalorder %s163, %s164
      %p173 = scmp.eq.s32.totalorder %s24, 0
      %p174 = por %p172, %p173
      %p175 = scmp.ne.s32.totalorder %s163, %s164
      %p176 = scmp.eq.s32.totalorder %s25, 1
      %p177 = por %p175, %p176
      %p179 = scmp.ne.s32.totalorder %s164, %s178
      %p180 = scmp.eq.s32.totalorder %s25, 0
      %p181 = por %p179, %p180
      %s183 = sadd.s32 %s182, 1
      %p186 = scmp.eq.s32.totalorder %s19, 1
      %p187 = scmp.ne.s32.totalorder %s182, %s184
      %p188 = scmp.eq.s32.totalorder %s19, 0
      %p189 = por %p187, %p188
      %p190 = scmp.ne.s32.totalorder %s182, %s184
      %p191 = scmp.eq.s32.totalorder %s24, 1
      %p192 = por %p190, %p191
      %p193 = scmp.ne.s32.totalorder %s184, %s185
      %p194 = scmp.eq.s32.totalorder %s24, 0
      %p195 = por %p193, %p194
      %p196 = scmp.ne.s32.totalorder %s184, %s185
      %p197 = scmp.eq.s32.totalorder %s25, 1
      %p198 = por %p196, %p197
      %p200 = scmp.ne.s32.totalorder %s185, %s199
      %p201 = scmp.eq.s32.totalorder %s25, 0
      %p202 = por %p200, %p201
      %s203 = ssub.s32 %s26, %s38
      %s204 = ssub.s32 %s27, %s34
      %s205 = sor.u32 %s203, %s204
      %p206 = scmp.eq.s32.totalorder %s205, 0
      %s208 = sadd.s32 %s207, 1
      %s209 = scalar_select %p206, %s207, %s208
      %p212 = pneg %p206
      %p213 = scmp.eq.s32.totalorder %s19, 1
      %p214 = por %p212, %p213
      %p215 = scmp.ne.s32.totalorder %s207, %s210
      %p216 = scmp.eq.s32.totalorder %s19, 0
      %p217 = por %p215, %p216
      %p218 = scmp.ne.s32.totalorder %s207, %s210
      %p219 = scmp.eq.s32.totalorder %s24, 1
      %p220 = por %p218, %p219
      %p221 = scmp.ne.s32.totalorder %s210, %s211
      %p222 = scmp.eq.s32.totalorder %s24, 0
      %p223 = por %p221, %p222
      %p224 = scmp.ne.s32.totalorder %s210, %s211
      %p225 = scmp.eq.s32.totalorder %s25, 1
      %p226 = por %p224, %p225
      %p228 = scmp.ne.s32.totalorder %s211, %s227
      %p229 = scmp.eq.s32.totalorder %s25, 0
      %p230 = por %p228, %p229
      %p231 = scmp.le.s32.totalorder 1, %s19
      %p232 = scmp.lt.s32.totalorder %s19, 3
      %p233 = pnand %p231, %p232
      %p234 = pneg %p233
      // Predicated region
      $region9: #{tpu_custom_call.1} parent=5 // pred_check
        _
      $region10: #{tpu_custom_call.1} parent=5 // pred_check_branch
        %236 = sbr.rel (%p233) target = $region12
      $region11: #{tpu_custom_call.1} parent=5 // pred_region
        %s237 = ssub.s32 %s19, 1
        // Predicated region
        $region13: #{tpu_custom_call.1} parent=11 // pred_check
          %p238 = pneg %p132
        $region14: #{tpu_custom_call.1} parent=11 // pred_check_branch
          %240 = sbr.rel (%p238) target = $region16
        $region15: #{tpu_custom_call.1} parent=11 // pred_region
          _
        $region16: #{tpu_custom_call.1} parent=11 // pred_fallthru
          _
        // Predicated region
        $region17: #{tpu_custom_call.1} parent=11 // pred_check
          %p241 = pneg %p153
        $region18: #{tpu_custom_call.1} parent=11 // pred_check_branch
          %243 = sbr.rel (%p241) target = $region20
        $region19: #{tpu_custom_call.1} parent=11 // pred_region
          _
        $region20: #{tpu_custom_call.1} parent=11 // pred_fallthru
          _
        // Predicated region
        $region21: #{tpu_custom_call.1} parent=11 // pred_check
          %p244 = pneg %p174
        $region22: #{tpu_custom_call.1} parent=11 // pred_check_branch
          %246 = sbr.rel (%p244) target = $region24
        $region23: #{tpu_custom_call.1} parent=11 // pred_region
          _
        $region24: #{tpu_custom_call.1} parent=11 // pred_fallthru
          _
        // Predicated region
        $region25: #{tpu_custom_call.1} parent=11 // pred_check
          %p247 = pneg %p195
        $region26: #{tpu_custom_call.1} parent=11 // pred_check_branch
          %249 = sbr.rel (%p247) target = $region28
        $region27: #{tpu_custom_call.1} parent=11 // pred_region
          _
        $region28: #{tpu_custom_call.1} parent=11 // pred_fallthru
          _
      $region12: #{tpu_custom_call.1} parent=5 // pred_fallthru
        _
      %p250 = scmp.lt.s32.totalorder %s19, 2
      // Predicated region
      $region29: #{tpu_custom_call.1} parent=5 // pred_check
        %p251 = pneg %p250
      $region30: #{tpu_custom_call.1} parent=5 // pred_check_branch
        %253 = sbr.rel (%p251) target = $region32
      $region31: #{tpu_custom_call.1} parent=5 // pred_region
        // Predicated region
        $region33: #{tpu_custom_call.1} parent=31 // pred_check
          %p254 = pneg %p53
        $region34: #{tpu_custom_call.1} parent=31 // pred_check_branch
          %256 = sbr.rel (%p254) target = $region36
        $region35: #{tpu_custom_call.1} parent=31 // pred_region
          %s257 = sand.u32 %s43, 1
          %s258 = scalar_lea.sflag [#allocation3], %s257
          %s259 = sand.u32 %s43, 1
          %s260 = smul.addr %s259, 256
          %s261 = scalar_lea.vmem [#allocation2], %s260
          %s262 = smul.u32 32, %s27
          %s264 = ssub.s32 4096, 4096
          %265 = vsyncadd %s258, %s264
          %s266 = smul.addr %s26, 32
          %s267 = sadd.s32 %s262, %s266
          %s268 = smul.addr %s267, 128
          %s269 = scalar_lea.hbm %s0, %s268
          %s270 = sshll.u32 %s261, 4
          %s271 = int_to_ptr.vmem [resolvable:$true] %s270
          %276 = dma.hbm_to_vmem [thread:$0]  %s269, 4096, %s271, %s258, 128, 128, 8
        $region36: #{tpu_custom_call.1} parent=31 // pred_fallthru
          _
        // Predicated region
        $region37: #{tpu_custom_call.1} parent=31 // pred_check
          %p277 = pneg %p79
        $region38: #{tpu_custom_call.1} parent=31 // pred_check_branch
          %279 = sbr.rel (%p277) target = $region40
        $region39: #{tpu_custom_call.1} parent=31 // pred_region
          %p280 = scmp.lt.s32.totalorder %s26, 1
          %s281 = scalar_select %p280, %s26, 1
          %s282 = smul.addr %s281, 16
          %s283 = smul.addr %s282, 4
          %s284 = scalar_lea.vmem %s1, %s283
        $region40: #{tpu_custom_call.1} parent=31 // pred_fallthru
          _
        // Predicated region
        $region41: #{tpu_custom_call.1} parent=31 // pred_check
          %p285 = pneg %p105
        $region42: #{tpu_custom_call.1} parent=31 // pred_check_branch
          %287 = sbr.rel (%p285) target = $region44
        $region43: #{tpu_custom_call.1} parent=31 // pred_region
          %p288 = scmp.lt.s32.totalorder %s26, 1
          %s289 = scalar_select %p288, %s26, 1
          %s290 = smul.addr %s289, 8
          %s291 = smul.addr %s290, 4
          %s292 = scalar_lea.vmem %s2, %s291
        $region44: #{tpu_custom_call.1} parent=31 // pred_fallthru
          _
      $region32: #{tpu_custom_call.1} parent=5 // pred_fallthru
        _
      %p293 = scmp.le.s32.totalorder 1, %s19
      %p294 = scmp.lt.s32.totalorder %s19, 3
      %p295 = pnand %p293, %p294
      %p296 = pneg %p295
      // Predicated region
      $region45: #{tpu_custom_call.1} parent=5 // pred_check
        _
      $region46: #{tpu_custom_call.1} parent=5 // pred_check_branch
        %298 = sbr.rel (%p295) target = $region48
      $region47: #{tpu_custom_call.1} parent=5 // pred_region
        %s299 = ssub.s32 %s19, 1
        %s300 = sand.u32 %s46, 1
        %s301 = scalar_lea.sflag [#allocation3], %s300
        %s302 = sand.u32 %s46, 1
        %s303 = smul.addr %s302, 256
        %s304 = scalar_lea.vmem [#allocation2], %s303
        // Predicated region
        $region49: #{tpu_custom_call.1} parent=47 // pred_check
          %p305 = pneg %p59
        $region50: #{tpu_custom_call.1} parent=47 // pred_check_branch
          %307 = sbr.rel (%p305) target = $region52
        $region51: #{tpu_custom_call.1} parent=47 // pred_region
          %308 = dma.done %s301, 4096
        $region52: #{tpu_custom_call.1} parent=47 // pred_fallthru
          _
        %s309 = sand.u32 %s46, 1
        %s310 = scalar_lea.sflag [#allocation3], %s309
        %s311 = sand.u32 %s46, 1
        %s312 = smul.addr %s311, 256
        %s313 = scalar_lea.vmem [#allocation2], %s312
        %p314 = pneg %p59
        %p315 = pneg %p56
        %p316 = scmp.lt.s32.totalorder %s28, 1
        %s317 = scalar_select %p316, %s28, 1
        %s318 = smul.addr %s317, 16
        %s319 = smul.addr %s318, 4
        %s320 = scalar_lea.vmem %s1, %s319
        %p321 = pneg %p85
        %p322 = pneg %p82
        %p323 = scmp.lt.s32.totalorder %s28, 1
        %s324 = scalar_select %p323, %s28, 1
        %s325 = smul.addr %s324, 8
        %s326 = smul.addr %s325, 4
        %s327 = scalar_lea.vmem %s2, %s326
        %p328 = pneg %p111
        %p329 = pneg %p108
        %p330 = pneg %p132
        %p331 = pneg %p129
        %p332 = pneg %p153
        %p333 = pneg %p150
        %p334 = pneg %p174
        %p335 = pneg %p171
        %p336 = pneg %p195
        %p337 = pneg %p192
        %p338 = pneg %p223
        %p339 = pneg %p220
        %s340 = sand.u32 %s210, 1
        %s341 = scalar_lea.sflag [#allocation4], %s340
        %s342 = sand.u32 %s210, 1
        %s343 = smul.addr %s342, 256
        %s344 = scalar_lea.vmem [#allocation5], %s343
        %s345 = smul.u32 32, %s29
        %p346 = scmp.lt.s32.totalorder %s28, 1
        %s347 = scalar_select %p346, %s28, 1
        %s348 = smul.addr %s347, 16
        %s349 = smul.addr %s348, 4
        %s350 = scalar_lea.vmem %s1, %s349
        %p351 = scmp.lt.s32.totalorder %s28, 1
        %s352 = scalar_select %p351, %s28, 1
        %s353 = smul.addr %s352, 8
        %s354 = smul.addr %s353, 4
        %s355 = scalar_lea.vmem %s2, %s354
        %s356 = smul.u32 32, %s29
        %v358 = vld [vmem:[%s304] sm:$0xff]
        %v359 = vld [vmem:[%s304 + $0x8] sm:$0xff]
        %v360 = vld [vmem:[%s304 + $0x10] sm:$0xff]
        %v361 = vld [vmem:[%s304 + $0x18] sm:$0xff]
        %v362 = vld [vmem:[%s304 + $0x20] sm:$0xff]
        %v363 = vld [vmem:[%s304 + $0x28] sm:$0xff]
        %v364 = vld [vmem:[%s304 + $0x30] sm:$0xff]
        %v365 = vld [vmem:[%s304 + $0x38] sm:$0xff]
        %v366 = vld [vmem:[%s304 + $0x40] sm:$0xff]
        %v367 = vld [vmem:[%s304 + $0x48] sm:$0xff]
        %v368 = vld [vmem:[%s304 + $0x50] sm:$0xff]
        %v369 = vld [vmem:[%s304 + $0x58] sm:$0xff]
        %v370 = vld [vmem:[%s304 + $0x60] sm:$0xff]
        %v371 = vld [vmem:[%s304 + $0x68] sm:$0xff]
        %v372 = vld [vmem:[%s304 + $0x70] sm:$0xff]
        %v373 = vld [vmem:[%s304 + $0x78] sm:$0xff]
        %v374 = vld [vmem:[%s304 + $0x80] sm:$0xff]
        %v375 = vld [vmem:[%s304 + $0x88] sm:$0xff]
        %v376 = vld [vmem:[%s304 + $0x90] sm:$0xff]
        %v377 = vld [vmem:[%s304 + $0x98] sm:$0xff]
        %v378 = vld [vmem:[%s304 + $0xa0] sm:$0xff]
        %v379 = vld [vmem:[%s304 + $0xa8] sm:$0xff]
        %v380 = vld [vmem:[%s304 + $0xb0] sm:$0xff]
        %v381 = vld [vmem:[%s304 + $0xb8] sm:$0xff]
        %v382 = vld [vmem:[%s304 + $0xc0] sm:$0xff]
        %v383 = vld [vmem:[%s304 + $0xc8] sm:$0xff]
        %v384 = vld [vmem:[%s304 + $0xd0] sm:$0xff]
        %v385 = vld [vmem:[%s304 + $0xd8] sm:$0xff]
        %v386 = vld [vmem:[%s304 + $0xe0] sm:$0xff]
        %v387 = vld [vmem:[%s304 + $0xe8] sm:$0xff]
        %v388 = vld [vmem:[%s304 + $0xf0] sm:$0xff]
        %v389 = vld [vmem:[%s304 + $0xf8] sm:$0xff]
        %v390 = vpack.c.bf16 %v359, %v358
        %v391 = vpack.c.bf16 %v361, %v360
        %v392 = vpack.c.bf16 %v363, %v362
        %v393 = vpack.c.bf16 %v365, %v364
        %v394 = vpack.c.bf16 %v367, %v366
        %v395 = vpack.c.bf16 %v369, %v368
        %v396 = vpack.c.bf16 %v371, %v370
        %v397 = vpack.c.bf16 %v373, %v372
        %v398 = vpack.c.bf16 %v375, %v374
        %v399 = vpack.c.bf16 %v377, %v376
        %v400 = vpack.c.bf16 %v379, %v378
        %v401 = vpack.c.bf16 %v381, %v380
        %v402 = vpack.c.bf16 %v383, %v382
        %v403 = vpack.c.bf16 %v385, %v384
        %v404 = vpack.c.bf16 %v387, %v386
        %v405 = vpack.c.bf16 %v389, %v388
        %v406 = vld [vmem:[%s3] sm:$0xf]
        %v407 = vld [vmem:[%s3 + $0x4] sm:$0xf]
        %v408 = vld [vmem:[%s3 + $0x8] sm:$0xf]
        %v409 = vld [vmem:[%s3 + $0xc] sm:$0xf]
        %v410 = vld [vmem:[%s3 + $0x10] sm:$0xf]
        %v411 = vld [vmem:[%s3 + $0x14] sm:$0xf]
        %v412 = vld [vmem:[%s3 + $0x18] sm:$0xf]
        %v413 = vld [vmem:[%s3 + $0x1c] sm:$0xf]
        %v414 = vld [vmem:[%s3 + $0x20] sm:$0xf]
        %v415 = vld [vmem:[%s3 + $0x24] sm:$0xf]
        %v416 = vld [vmem:[%s3 + $0x28] sm:$0xf]
        %v417 = vld [vmem:[%s3 + $0x2c] sm:$0xf]
        %v418 = vld [vmem:[%s3 + $0x30] sm:$0xf]
        %v419 = vld [vmem:[%s3 + $0x34] sm:$0xf]
        %v420 = vld [vmem:[%s3 + $0x38] sm:$0xf]
        %v421 = vld [vmem:[%s3 + $0x3c] sm:$0xf]
        %v422 = vld [vmem:[%s4] sm:$0x1]
        %v424 = vlaneseq
        %v425 = vshrl.u32 %v424, 7
        %v426 = vsub.s32 0, %v425
        %v427 = vrot.slane %v422, %v426
        %v445 = vunpack.c.l.b16 %v406
        %v446 = vunpack.c.l.b16 %v407
        %v447 = vunpack.c.l.b16 %v408
        %v448 = vunpack.c.l.b16 %v409
        %v449 = vunpack.c.l.b16 %v410
        %v450 = vunpack.c.l.b16 %v411
        %v451 = vunpack.c.l.b16 %v412
        %v452 = vunpack.c.l.b16 %v413
        %v453 = vunpack.c.l.b16 %v414
        %v454 = vunpack.c.l.b16 %v415
        %v455 = vunpack.c.l.b16 %v416
        %v456 = vunpack.c.l.b16 %v417
        %v457 = vunpack.c.l.b16 %v418
        %v458 = vunpack.c.l.b16 %v419
        %v459 = vunpack.c.l.b16 %v420
        %v460 = vunpack.c.l.b16 %v421
        %v461 = vpack.c.b16 %v446, %v445
        %v462 = vpack.c.b16 %v448, %v447
        %v463 = vpack.c.b16 %v450, %v449
        %v464 = vpack.c.b16 %v452, %v451
        %v465 = vpack.c.b16 %v454, %v453
        %v466 = vpack.c.b16 %v456, %v455
        %v467 = vpack.c.b16 %v458, %v457
        %v468 = vpack.c.b16 %v460, %v459
        %477 = vmatprep.subr.bf16.mxu0 0
        %478 = vmatpush1.bf16.msra.mxu0 %v468
        %479 = vmatprep.subr.bf16.mxu0 0
        %480 = vmatpush1.bf16.msra.mxu0 %v467
        %481 = vmatprep.subr.bf16.mxu0 0
        %482 = vmatpush1.bf16.msra.mxu0 %v466
        %483 = vmatprep.subr.bf16.mxu0 0
        %484 = vmatpush1.bf16.msra.mxu0 %v465
        %485 = vmatprep.subr.bf16.mxu0 0
        %486 = vmatpush1.bf16.msra.mxu0 %v464
        %487 = vmatprep.subr.bf16.mxu0 0
        %488 = vmatpush1.bf16.msra.mxu0 %v463
        %489 = vmatprep.subr.bf16.mxu0 0
        %490 = vmatpush1.bf16.msra.mxu0 %v462
        %491 = vmatprep.subr.bf16.mxu0 0
        %492 = vmatpush1.bf16.msra.mxu0 %v461
        %493 = vmatprep.subr.bf16.mxu0 0
        %494 = vmatpush2.bf16.msra.mxu0 0
        %495 = vmatprep.subr.bf16.mxu0 0
        %496 = vmatpush2.bf16.msra.mxu0 0
        %497 = vmatprep.subr.bf16.mxu0 0
        %498 = vmatpush2.bf16.msra.mxu0 0
        %499 = vmatprep.subr.bf16.mxu0 0
        %500 = vmatpush2.bf16.msra.mxu0 0
        %501 = vmatprep.subr.bf16.mxu0 0
        %502 = vmatpush2.bf16.msra.mxu0 0
        %503 = vmatprep.subr.bf16.mxu0 0
        %504 = vmatpush2.bf16.msra.mxu0 0
        %505 = vmatprep.subr.bf16.mxu0 0
        %506 = vmatpush2.bf16.msra.mxu0 0
        %507 = vmatprep.subr.bf16.mxu0 0
        %508 = vmatpush2.bf16.msra.mxu0 0
        %509 = vmatprep.mubr.bf16.mxu0 0
        %510 = vmatmul.mubr.bf16.gmra.mxu0 %v390
        %v511 = vpop.f32.mrf.mxu0
        %v512 = vadd.f32 %v427, %v511
        %v513 = vpop.f32.mrf.mxu0
        %v514 = vpop.f32.mrf.mxu0
        %v515 = vadd.f32 %v427, %v514
        %v516 = vpop.f32.mrf.mxu0
        %517 = vmatprep.mubr.bf16.mxu0 0
        %518 = vmatmul.mubr.bf16.gmra.mxu0 %v391
        %v519 = vpop.f32.mrf.mxu0
        %v520 = vadd.f32 %v427, %v519
        %v521 = vpop.f32.mrf.mxu0
        %v522 = vpop.f32.mrf.mxu0
        %v523 = vadd.f32 %v427, %v522
        %v524 = vpop.f32.mrf.mxu0
        %525 = vmatprep.mubr.bf16.mxu0 0
        %526 = vmatmul.mubr.bf16.gmra.mxu0 %v392
        %v527 = vpop.f32.mrf.mxu0
        %v528 = vadd.f32 %v427, %v527
        %v529 = vpop.f32.mrf.mxu0
        %v530 = vpop.f32.mrf.mxu0
        %v531 = vadd.f32 %v427, %v530
        %v532 = vpop.f32.mrf.mxu0
        %533 = vmatprep.mubr.bf16.mxu0 0
        %534 = vmatmul.mubr.bf16.gmra.mxu0 %v393
        %v535 = vpop.f32.mrf.mxu0
        %v536 = vadd.f32 %v427, %v535
        %v537 = vpop.f32.mrf.mxu0
        %v538 = vpop.f32.mrf.mxu0
        %v539 = vadd.f32 %v427, %v538
        %v540 = vpop.f32.mrf.mxu0
        %541 = vmatprep.mubr.bf16.mxu0 0
        %542 = vmatmul.mubr.bf16.gmra.mxu0 %v394
        %v543 = vpop.f32.mrf.mxu0
        %v544 = vadd.f32 %v427, %v543
        %v545 = vpop.f32.mrf.mxu0
        %v546 = vpop.f32.mrf.mxu0
        %v547 = vadd.f32 %v427, %v546
        %v548 = vpop.f32.mrf.mxu0
        %549 = vmatprep.mubr.bf16.mxu0 0
        %550 = vmatmul.mubr.bf16.gmra.mxu0 %v395
        %v551 = vpop.f32.mrf.mxu0
        %v552 = vadd.f32 %v427, %v551
        %v553 = vpop.f32.mrf.mxu0
        %v554 = vpop.f32.mrf.mxu0
        %v555 = vadd.f32 %v427, %v554
        %v556 = vpop.f32.mrf.mxu0
        %557 = vmatprep.mubr.bf16.mxu0 0
        %558 = vmatmul.mubr.bf16.gmra.mxu0 %v396
        %v559 = vpop.f32.mrf.mxu0
        %v560 = vadd.f32 %v427, %v559
        %v561 = vpop.f32.mrf.mxu0
        %v562 = vpop.f32.mrf.mxu0
        %v563 = vadd.f32 %v427, %v562
        %v564 = vpop.f32.mrf.mxu0
        %565 = vmatprep.mubr.bf16.mxu0 0
        %566 = vmatmul.mubr.bf16.gmra.mxu0 %v397
        %v567 = vpop.f32.mrf.mxu0
        %v568 = vadd.f32 %v427, %v567
        %v569 = vpop.f32.mrf.mxu0
        %v570 = vpop.f32.mrf.mxu0
        %v571 = vadd.f32 %v427, %v570
        %v572 = vpop.f32.mrf.mxu0
        %573 = vmatprep.mubr.bf16.mxu0 0
        %574 = vmatmul.mubr.bf16.gmra.mxu0 %v398
        %v575 = vpop.f32.mrf.mxu0
        %v576 = vadd.f32 %v427, %v575
        %v577 = vpop.f32.mrf.mxu0
        %v578 = vpop.f32.mrf.mxu0
        %v579 = vadd.f32 %v427, %v578
        %v580 = vpop.f32.mrf.mxu0
        %581 = vmatprep.mubr.bf16.mxu0 0
        %582 = vmatmul.mubr.bf16.gmra.mxu0 %v399
        %v583 = vpop.f32.mrf.mxu0
        %v584 = vadd.f32 %v427, %v583
        %v585 = vpop.f32.mrf.mxu0
        %v586 = vpop.f32.mrf.mxu0
        %v587 = vadd.f32 %v427, %v586
        %v588 = vpop.f32.mrf.mxu0
        %589 = vmatprep.mubr.bf16.mxu0 0
        %590 = vmatmul.mubr.bf16.gmra.mxu0 %v400
        %v591 = vpop.f32.mrf.mxu0
        %v592 = vadd.f32 %v427, %v591
        %v593 = vpop.f32.mrf.mxu0
        %v594 = vpop.f32.mrf.mxu0
        %v595 = vadd.f32 %v427, %v594
        %v596 = vpop.f32.mrf.mxu0
        %597 = vmatprep.mubr.bf16.mxu0 0
        %598 = vmatmul.mubr.bf16.gmra.mxu0 %v401
        %v599 = vpop.f32.mrf.mxu0
        %v600 = vadd.f32 %v427, %v599
        %v601 = vpop.f32.mrf.mxu0
        %v602 = vpop.f32.mrf.mxu0
        %v603 = vadd.f32 %v427, %v602
        %v604 = vpop.f32.mrf.mxu0
        %605 = vmatprep.mubr.bf16.mxu0 0
        %606 = vmatmul.mubr.bf16.gmra.mxu0 %v402
        %v607 = vpop.f32.mrf.mxu0
        %v608 = vadd.f32 %v427, %v607
        %v609 = vpop.f32.mrf.mxu0
        %v610 = vpop.f32.mrf.mxu0
        %v611 = vadd.f32 %v427, %v610
        %v612 = vpop.f32.mrf.mxu0
        %613 = vmatprep.mubr.bf16.mxu0 0
        %614 = vmatmul.mubr.bf16.gmra.mxu0 %v403
        %v615 = vpop.f32.mrf.mxu0
        %v616 = vadd.f32 %v427, %v615
        %v617 = vpop.f32.mrf.mxu0
        %v618 = vpop.f32.mrf.mxu0
        %v619 = vadd.f32 %v427, %v618
        %v620 = vpop.f32.mrf.mxu0
        %621 = vmatprep.mubr.bf16.mxu0 0
        %622 = vmatmul.mubr.bf16.gmra.mxu0 %v404
        %v623 = vpop.f32.mrf.mxu0
        %v624 = vadd.f32 %v427, %v623
        %v625 = vpop.f32.mrf.mxu0
        %v626 = vpop.f32.mrf.mxu0
        %v627 = vadd.f32 %v427, %v626
        %v628 = vpop.f32.mrf.mxu0
        %629 = vmatprep.mubr.bf16.mxu0 0
        %630 = vmatmul.mubr.bf16.gmra.mxu0 %v405
        %v631 = vpop.f32.mrf.mxu0
        %v632 = vadd.f32 %v427, %v631
        %v633 = vpop.f32.mrf.mxu0
        %v634 = vpop.f32.mrf.mxu0
        %v635 = vadd.f32 %v427, %v634
        %v636 = vpop.f32.mrf.mxu0
        %637 = vdwg.mxu0
        %v638 = vpack.c.bf16 %v515, %v512
        %v639 = vpack.c.bf16 %v523, %v520
        %v640 = vpack.c.bf16 %v531, %v528
        %v641 = vpack.c.bf16 %v539, %v536
        %v642 = vpack.c.bf16 %v547, %v544
        %v643 = vpack.c.bf16 %v555, %v552
        %v644 = vpack.c.bf16 %v563, %v560
        %v645 = vpack.c.bf16 %v571, %v568
        %v646 = vpack.c.bf16 %v579, %v576
        %v647 = vpack.c.bf16 %v587, %v584
        %v648 = vpack.c.bf16 %v595, %v592
        %v649 = vpack.c.bf16 %v603, %v600
        %v650 = vpack.c.bf16 %v611, %v608
        %v651 = vpack.c.bf16 %v619, %v616
        %v652 = vpack.c.bf16 %v627, %v624
        %v653 = vpack.c.bf16 %v635, %v632
        %v654 = vld [vmem:[%s350] sm:$0xf]
        %v655 = vld [vmem:[%s350 + $0x4] sm:$0xf]
        %v656 = vld [vmem:[%s350 + $0x8] sm:$0xf]
        %v657 = vld [vmem:[%s350 + $0xc] sm:$0xf]
        %v658 = vld [vmem:[%s350 + $0x10] sm:$0xf]
        %v659 = vld [vmem:[%s350 + $0x14] sm:$0xf]
        %v660 = vld [vmem:[%s350 + $0x18] sm:$0xf]
        %v661 = vld [vmem:[%s350 + $0x1c] sm:$0xf]
        %v662 = vld [vmem:[%s350 + $0x20] sm:$0xf]
        %v663 = vld [vmem:[%s350 + $0x24] sm:$0xf]
        %v664 = vld [vmem:[%s350 + $0x28] sm:$0xf]
        %v665 = vld [vmem:[%s350 + $0x2c] sm:$0xf]
        %v666 = vld [vmem:[%s350 + $0x30] sm:$0xf]
        %v667 = vld [vmem:[%s350 + $0x34] sm:$0xf]
        %v668 = vld [vmem:[%s350 + $0x38] sm:$0xf]
        %v669 = vld [vmem:[%s350 + $0x3c] sm:$0xf]
        %v686 = vunpack.c.l.b16 %v654
        %v687 = vunpack.c.l.b16 %v655
        %v688 = vunpack.c.l.b16 %v656
        %v689 = vunpack.c.l.b16 %v657
        %v690 = vunpack.c.l.b16 %v658
        %v691 = vunpack.c.l.b16 %v659
        %v692 = vunpack.c.l.b16 %v660
        %v693 = vunpack.c.l.b16 %v661
        %v694 = vunpack.c.l.b16 %v662
        %v695 = vunpack.c.l.b16 %v663
        %v696 = vunpack.c.l.b16 %v664
        %v697 = vunpack.c.l.b16 %v665
        %v698 = vunpack.c.l.b16 %v666
        %v699 = vunpack.c.l.b16 %v667
        %v700 = vunpack.c.l.b16 %v668
        %v701 = vunpack.c.l.b16 %v669
        %v702 = vpack.c.b16 %v687, %v686
        %v703 = vpack.c.b16 %v689, %v688
        %v704 = vpack.c.b16 %v691, %v690
        %v705 = vpack.c.b16 %v693, %v692
        %v706 = vpack.c.b16 %v695, %v694
        %v707 = vpack.c.b16 %v697, %v696
        %v708 = vpack.c.b16 %v699, %v698
        %v709 = vpack.c.b16 %v701, %v700
        %718 = vmatprep.subr.bf16.mxu0 0
        %719 = vmatpush1.bf16.msra.mxu0 %v709
        %720 = vmatprep.subr.bf16.mxu0 0
        %721 = vmatpush1.bf16.msra.mxu0 %v708
        %722 = vmatprep.subr.bf16.mxu0 0
        %723 = vmatpush1.bf16.msra.mxu0 %v707
        %724 = vmatprep.subr.bf16.mxu0 0
        %725 = vmatpush1.bf16.msra.mxu0 %v706
        %726 = vmatprep.subr.bf16.mxu0 0
        %727 = vmatpush1.bf16.msra.mxu0 %v705
        %728 = vmatprep.subr.bf16.mxu0 0
        %729 = vmatpush1.bf16.msra.mxu0 %v704
        %730 = vmatprep.subr.bf16.mxu0 0
        %731 = vmatpush1.bf16.msra.mxu0 %v703
        %732 = vmatprep.subr.bf16.mxu0 0
        %733 = vmatpush1.bf16.msra.mxu0 %v702
        %734 = vmatprep.subr.bf16.mxu0 0
        %735 = vmatpush2.bf16.msra.mxu0 0
        %736 = vmatprep.subr.bf16.mxu0 0
        %737 = vmatpush2.bf16.msra.mxu0 0
        %738 = vmatprep.subr.bf16.mxu0 0
        %739 = vmatpush2.bf16.msra.mxu0 0
        %740 = vmatprep.subr.bf16.mxu0 0
        %741 = vmatpush2.bf16.msra.mxu0 0
        %742 = vmatprep.subr.bf16.mxu0 0
        %743 = vmatpush2.bf16.msra.mxu0 0
        %744 = vmatprep.subr.bf16.mxu0 0
        %745 = vmatpush2.bf16.msra.mxu0 0
        %746 = vmatprep.subr.bf16.mxu0 0
        %747 = vmatpush2.bf16.msra.mxu0 0
        %748 = vmatprep.subr.bf16.mxu0 0
        %749 = vmatpush2.bf16.msra.mxu0 0
        %750 = vmatprep.mubr.bf16.mxu0 0
        %751 = vmatmul.mubr.bf16.gmra.mxu0 %v638
        %v752 = vpop.f32.mrf.mxu0
        %v753 = vadd.f32 0.0, %v752
        %v754 = vpop.f32.mrf.mxu0
        %v755 = vpop.f32.mrf.mxu0
        %v756 = vadd.f32 0.0, %v755
        %v757 = vpop.f32.mrf.mxu0
        %758 = vmatprep.mubr.bf16.mxu0 0
        %759 = vmatmul.mubr.bf16.gmra.mxu0 %v639
        %v760 = vpop.f32.mrf.mxu0
        %v761 = vadd.f32 0.0, %v760
        %v762 = vpop.f32.mrf.mxu0
        %v763 = vpop.f32.mrf.mxu0
        %v764 = vadd.f32 0.0, %v763
        %v765 = vpop.f32.mrf.mxu0
        %766 = vmatprep.mubr.bf16.mxu0 0
        %767 = vmatmul.mubr.bf16.gmra.mxu0 %v640
        %v768 = vpop.f32.mrf.mxu0
        %v769 = vadd.f32 0.0, %v768
        %v770 = vpop.f32.mrf.mxu0
        %v771 = vpop.f32.mrf.mxu0
        %v772 = vadd.f32 0.0, %v771
        %v773 = vpop.f32.mrf.mxu0
        %774 = vmatprep.mubr.bf16.mxu0 0
        %775 = vmatmul.mubr.bf16.gmra.mxu0 %v641
        %v776 = vpop.f32.mrf.mxu0
        %v777 = vadd.f32 0.0, %v776
        %v778 = vpop.f32.mrf.mxu0
        %v779 = vpop.f32.mrf.mxu0
        %v780 = vadd.f32 0.0, %v779
        %v781 = vpop.f32.mrf.mxu0
        %782 = vmatprep.mubr.bf16.mxu0 0
        %783 = vmatmul.mubr.bf16.gmra.mxu0 %v642
        %v784 = vpop.f32.mrf.mxu0
        %v785 = vadd.f32 0.0, %v784
        %v786 = vpop.f32.mrf.mxu0
        %v787 = vpop.f32.mrf.mxu0
        %v788 = vadd.f32 0.0, %v787
        %v789 = vpop.f32.mrf.mxu0
        %790 = vmatprep.mubr.bf16.mxu0 0
        %791 = vmatmul.mubr.bf16.gmra.mxu0 %v643
        %v792 = vpop.f32.mrf.mxu0
        %v793 = vadd.f32 0.0, %v792
        %v794 = vpop.f32.mrf.mxu0
        %v795 = vpop.f32.mrf.mxu0
        %v796 = vadd.f32 0.0, %v795
        %v797 = vpop.f32.mrf.mxu0
        %798 = vmatprep.mubr.bf16.mxu0 0
        %799 = vmatmul.mubr.bf16.gmra.mxu0 %v644
        %v800 = vpop.f32.mrf.mxu0
        %v801 = vadd.f32 0.0, %v800
        %v802 = vpop.f32.mrf.mxu0
        %v803 = vpop.f32.mrf.mxu0
        %v804 = vadd.f32 0.0, %v803
        %v805 = vpop.f32.mrf.mxu0
        %806 = vmatprep.mubr.bf16.mxu0 0
        %807 = vmatmul.mubr.bf16.gmra.mxu0 %v645
        %v808 = vpop.f32.mrf.mxu0
        %v809 = vadd.f32 0.0, %v808
        %v810 = vpop.f32.mrf.mxu0
        %v811 = vpop.f32.mrf.mxu0
        %v812 = vadd.f32 0.0, %v811
        %v813 = vpop.f32.mrf.mxu0
        %814 = vmatprep.mubr.bf16.mxu0 0
        %815 = vmatmul.mubr.bf16.gmra.mxu0 %v646
        %v816 = vpop.f32.mrf.mxu0
        %v817 = vadd.f32 0.0, %v816
        %v818 = vpop.f32.mrf.mxu0
        %v819 = vpop.f32.mrf.mxu0
        %v820 = vadd.f32 0.0, %v819
        %v821 = vpop.f32.mrf.mxu0
        %822 = vmatprep.mubr.bf16.mxu0 0
        %823 = vmatmul.mubr.bf16.gmra.mxu0 %v647
        %v824 = vpop.f32.mrf.mxu0
        %v825 = vadd.f32 0.0, %v824
        %v826 = vpop.f32.mrf.mxu0
        %v827 = vpop.f32.mrf.mxu0
        %v828 = vadd.f32 0.0, %v827
        %v829 = vpop.f32.mrf.mxu0
        %830 = vmatprep.mubr.bf16.mxu0 0
        %831 = vmatmul.mubr.bf16.gmra.mxu0 %v648
        %v832 = vpop.f32.mrf.mxu0
        %v833 = vadd.f32 0.0, %v832
        %v834 = vpop.f32.mrf.mxu0
        %v835 = vpop.f32.mrf.mxu0
        %v836 = vadd.f32 0.0, %v835
        %v837 = vpop.f32.mrf.mxu0
        %838 = vmatprep.mubr.bf16.mxu0 0
        %839 = vmatmul.mubr.bf16.gmra.mxu0 %v649
        %v840 = vpop.f32.mrf.mxu0
        %v841 = vadd.f32 0.0, %v840
        %v842 = vpop.f32.mrf.mxu0
        %v843 = vpop.f32.mrf.mxu0
        %v844 = vadd.f32 0.0, %v843
        %v845 = vpop.f32.mrf.mxu0
        %846 = vmatprep.mubr.bf16.mxu0 0
        %847 = vmatmul.mubr.bf16.gmra.mxu0 %v650
        %v848 = vpop.f32.mrf.mxu0
        %v849 = vadd.f32 0.0, %v848
        %v850 = vpop.f32.mrf.mxu0
        %v851 = vpop.f32.mrf.mxu0
        %v852 = vadd.f32 0.0, %v851
        %v853 = vpop.f32.mrf.mxu0
        %854 = vmatprep.mubr.bf16.mxu0 0
        %855 = vmatmul.mubr.bf16.gmra.mxu0 %v651
        %v856 = vpop.f32.mrf.mxu0
        %v857 = vadd.f32 0.0, %v856
        %v858 = vpop.f32.mrf.mxu0
        %v859 = vpop.f32.mrf.mxu0
        %v860 = vadd.f32 0.0, %v859
        %v861 = vpop.f32.mrf.mxu0
        %862 = vmatprep.mubr.bf16.mxu0 0
        %863 = vmatmul.mubr.bf16.gmra.mxu0 %v652
        %v864 = vpop.f32.mrf.mxu0
        %v865 = vadd.f32 0.0, %v864
        %v866 = vpop.f32.mrf.mxu0
        %v867 = vpop.f32.mrf.mxu0
        %v868 = vadd.f32 0.0, %v867
        %v869 = vpop.f32.mrf.mxu0
        %870 = vmatprep.mubr.bf16.mxu0 0
        %871 = vmatmul.mubr.bf16.gmra.mxu0 %v653
        %v872 = vpop.f32.mrf.mxu0
        %v873 = vadd.f32 0.0, %v872
        %v874 = vpop.f32.mrf.mxu0
        %v875 = vpop.f32.mrf.mxu0
        %v876 = vadd.f32 0.0, %v875
        %v877 = vpop.f32.mrf.mxu0
        %878 = vdwg.mxu0
        %vm879 = vcmask 523264
        %v880 = vsel %vm879, %v753, -inf
        %881 = vmax.xlane.f32.xlu0 %v880
        %v882 = vpop.xlane.xlu0 %881
        %v883 = vsel %vm879, %v756, -inf
        %884 = vmax.xlane.f32.xlu0 %v883
        %v885 = vpop.xlane.xlu0 %884
        %v886 = vsel %vm879, %v761, -inf
        %887 = vmax.xlane.f32.xlu0 %v886
        %v888 = vpop.xlane.xlu0 %887
        %v889 = vsel %vm879, %v764, -inf
        %890 = vmax.xlane.f32.xlu0 %v889
        %v891 = vpop.xlane.xlu0 %890
        %v892 = vsel %vm879, %v769, -inf
        %893 = vmax.xlane.f32.xlu0 %v892
        %v894 = vpop.xlane.xlu0 %893
        %v895 = vsel %vm879, %v772, -inf
        %896 = vmax.xlane.f32.xlu0 %v895
        %v897 = vpop.xlane.xlu0 %896
        %v898 = vsel %vm879, %v777, -inf
        %899 = vmax.xlane.f32.xlu0 %v898
        %v900 = vpop.xlane.xlu0 %899
        %v901 = vsel %vm879, %v780, -inf
        %902 = vmax.xlane.f32.xlu0 %v901
        %v903 = vpop.xlane.xlu0 %902
        %v904 = vsel %vm879, %v785, -inf
        %905 = vmax.xlane.f32.xlu0 %v904
        %v906 = vpop.xlane.xlu0 %905
        %v907 = vsel %vm879, %v788, -inf
        %908 = vmax.xlane.f32.xlu0 %v907
        %v909 = vpop.xlane.xlu0 %908
        %v910 = vsel %vm879, %v793, -inf
        %911 = vmax.xlane.f32.xlu0 %v910
        %v912 = vpop.xlane.xlu0 %911
        %v913 = vsel %vm879, %v796, -inf
        %914 = vmax.xlane.f32.xlu0 %v913
        %v915 = vpop.xlane.xlu0 %914
        %v916 = vsel %vm879, %v801, -inf
        %917 = vmax.xlane.f32.xlu0 %v916
        %v918 = vpop.xlane.xlu0 %917
        %v919 = vsel %vm879, %v804, -inf
        %920 = vmax.xlane.f32.xlu0 %v919
        %v921 = vpop.xlane.xlu0 %920
        %v922 = vsel %vm879, %v809, -inf
        %923 = vmax.xlane.f32.xlu0 %v922
        %v924 = vpop.xlane.xlu0 %923
        %v925 = vsel %vm879, %v812, -inf
        %926 = vmax.xlane.f32.xlu0 %v925
        %v927 = vpop.xlane.xlu0 %926
        %v928 = vsel %vm879, %v817, -inf
        %929 = vmax.xlane.f32.xlu0 %v928
        %v930 = vpop.xlane.xlu0 %929
        %v931 = vsel %vm879, %v820, -inf
        %932 = vmax.xlane.f32.xlu0 %v931
        %v933 = vpop.xlane.xlu0 %932
        %v934 = vsel %vm879, %v825, -inf
        %935 = vmax.xlane.f32.xlu0 %v934
        %v936 = vpop.xlane.xlu0 %935
        %v937 = vsel %vm879, %v828, -inf
        %938 = vmax.xlane.f32.xlu0 %v937
        %v939 = vpop.xlane.xlu0 %938
        %v940 = vsel %vm879, %v833, -inf
        %941 = vmax.xlane.f32.xlu0 %v940
        %v942 = vpop.xlane.xlu0 %941
        %v943 = vsel %vm879, %v836, -inf
        %944 = vmax.xlane.f32.xlu0 %v943
        %v945 = vpop.xlane.xlu0 %944
        %v946 = vsel %vm879, %v841, -inf
        %947 = vmax.xlane.f32.xlu0 %v946
        %v948 = vpop.xlane.xlu0 %947
        %v949 = vsel %vm879, %v844, -inf
        %950 = vmax.xlane.f32.xlu0 %v949
        %v951 = vpop.xlane.xlu0 %950
        %v952 = vsel %vm879, %v849, -inf
        %953 = vmax.xlane.f32.xlu0 %v952
        %v954 = vpop.xlane.xlu0 %953
        %v955 = vsel %vm879, %v852, -inf
        %956 = vmax.xlane.f32.xlu0 %v955
        %v957 = vpop.xlane.xlu0 %956
        %v958 = vsel %vm879, %v857, -inf
        %959 = vmax.xlane.f32.xlu0 %v958
        %v960 = vpop.xlane.xlu0 %959
        %v961 = vsel %vm879, %v860, -inf
        %962 = vmax.xlane.f32.xlu0 %v961
        %v963 = vpop.xlane.xlu0 %962
        %v964 = vsel %vm879, %v865, -inf
        %965 = vmax.xlane.f32.xlu0 %v964
        %v966 = vpop.xlane.xlu0 %965
        %v967 = vsel %vm879, %v868, -inf
        %968 = vmax.xlane.f32.xlu0 %v967
        %v969 = vpop.xlane.xlu0 %968
        %v970 = vsel %vm879, %v873, -inf
        %971 = vmax.xlane.f32.xlu0 %v970
        %v972 = vpop.xlane.xlu0 %971
        %v973 = vsel %vm879, %v876, -inf
        %974 = vmax.xlane.f32.xlu0 %v973
        %v975 = vpop.xlane.xlu0 %974
        %v976 = vsub.f32 %v753, %v882
        %v977 = vsub.f32 %v756, %v885
        %v978 = vsub.f32 %v761, %v888
        %v979 = vsub.f32 %v764, %v891
        %v980 = vsub.f32 %v769, %v894
        %v981 = vsub.f32 %v772, %v897
        %v982 = vsub.f32 %v777, %v900
        %v983 = vsub.f32 %v780, %v903
        %v984 = vsub.f32 %v785, %v906
        %v985 = vsub.f32 %v788, %v909
        %v986 = vsub.f32 %v793, %v912
        %v987 = vsub.f32 %v796, %v915
        %v988 = vsub.f32 %v801, %v918
        %v989 = vsub.f32 %v804, %v921
        %v990 = vsub.f32 %v809, %v924
        %v991 = vsub.f32 %v812, %v927
        %v992 = vsub.f32 %v817, %v930
        %v993 = vsub.f32 %v820, %v933
        %v994 = vsub.f32 %v825, %v936
        %v995 = vsub.f32 %v828, %v939
        %v996 = vsub.f32 %v833, %v942
        %v997 = vsub.f32 %v836, %v945
        %v998 = vsub.f32 %v841, %v948
        %v999 = vsub.f32 %v844, %v951
        %v1000 = vsub.f32 %v849, %v954
        %v1001 = vsub.f32 %v852, %v957
        %v1002 = vsub.f32 %v857, %v960
        %v1003 = vsub.f32 %v860, %v963
        %v1004 = vsub.f32 %v865, %v966
        %v1005 = vsub.f32 %v868, %v969
        %v1006 = vsub.f32 %v873, %v972
        %v1007 = vsub.f32 %v876, %v975
        %v1008 = vmul.f32 %v976, 1.442695
        %v1009 = vpow.pop %v1008
        %v1010 = vmul.f32 %v977, 1.442695
        %v1011 = vpow.pop %v1010
        %v1012 = vmul.f32 %v978, 1.442695
        %v1013 = vpow.pop %v1012
        %v1014 = vmul.f32 %v979, 1.442695
        %v1015 = vpow.pop %v1014
        %v1016 = vmul.f32 %v980, 1.442695
        %v1017 = vpow.pop %v1016
        %v1018 = vmul.f32 %v981, 1.442695
        %v1019 = vpow.pop %v1018
        %v1020 = vmul.f32 %v982, 1.442695
        %v1021 = vpow.pop %v1020
        %v1022 = vmul.f32 %v983, 1.442695
        %v1023 = vpow.pop %v1022
        %v1024 = vmul.f32 %v984, 1.442695
        %v1025 = vpow.pop %v1024
        %v1026 = vmul.f32 %v985, 1.442695
        %v1027 = vpow.pop %v1026
        %v1028 = vmul.f32 %v986, 1.442695
        %v1029 = vpow.pop %v1028
        %v1030 = vmul.f32 %v987, 1.442695
        %v1031 = vpow.pop %v1030
        %v1032 = vmul.f32 %v988, 1.442695
        %v1033 = vpow.pop %v1032
        %v1034 = vmul.f32 %v989, 1.442695
        %v1035 = vpow.pop %v1034
        %v1036 = vmul.f32 %v990, 1.442695
        %v1037 = vpow.pop %v1036
        %v1038 = vmul.f32 %v991, 1.442695
        %v1039 = vpow.pop %v1038
        %v1040 = vmul.f32 %v992, 1.442695
        %v1041 = vpow.pop %v1040
        %v1042 = vmul.f32 %v993, 1.442695
        %v1043 = vpow.pop %v1042
        %v1044 = vmul.f32 %v994, 1.442695
        %v1045 = vpow.pop %v1044
        %v1046 = vmul.f32 %v995, 1.442695
        %v1047 = vpow.pop %v1046
        %v1048 = vmul.f32 %v996, 1.442695
        %v1049 = vpow.pop %v1048
        %v1050 = vmul.f32 %v997, 1.442695
        %v1051 = vpow.pop %v1050
        %v1052 = vmul.f32 %v998, 1.442695
        %v1053 = vpow.pop %v1052
        %v1054 = vmul.f32 %v999, 1.442695
        %v1055 = vpow.pop %v1054
        %v1056 = vmul.f32 %v1000, 1.442695
        %v1057 = vpow.pop %v1056
        %v1058 = vmul.f32 %v1001, 1.442695
        %v1059 = vpow.pop %v1058
        %v1060 = vmul.f32 %v1002, 1.442695
        %v1061 = vpow.pop %v1060
        %v1062 = vmul.f32 %v1003, 1.442695
        %v1063 = vpow.pop %v1062
        %v1064 = vmul.f32 %v1004, 1.442695
        %v1065 = vpow.pop %v1064
        %v1066 = vmul.f32 %v1005, 1.442695
        %v1067 = vpow.pop %v1066
        %v1068 = vmul.f32 %v1006, 1.442695
        %v1069 = vpow.pop %v1068
        %v1070 = vmul.f32 %v1007, 1.442695
        %v1071 = vpow.pop %v1070
        %v1072 = vsel %vm879, %v1009, 0.0
        %1073 = vadd.xlane.f32.xlu0 %v1072
        %v1074 = vpop.xlane.xlu0 %1073
        %v1075 = vsel %vm879, %v1011, 0.0
        %1076 = vadd.xlane.f32.xlu0 %v1075
        %v1077 = vpop.xlane.xlu0 %1076
        %v1078 = vsel %vm879, %v1013, 0.0
        %1079 = vadd.xlane.f32.xlu0 %v1078
        %v1080 = vpop.xlane.xlu0 %1079
        %v1081 = vsel %vm879, %v1015, 0.0
        %1082 = vadd.xlane.f32.xlu0 %v1081
        %v1083 = vpop.xlane.xlu0 %1082
        %v1084 = vsel %vm879, %v1017, 0.0
        %1085 = vadd.xlane.f32.xlu0 %v1084
        %v1086 = vpop.xlane.xlu0 %1085
        %v1087 = vsel %vm879, %v1019, 0.0
        %1088 = vadd.xlane.f32.xlu0 %v1087
        %v1089 = vpop.xlane.xlu0 %1088
        %v1090 = vsel %vm879, %v1021, 0.0
        %1091 = vadd.xlane.f32.xlu0 %v1090
        %v1092 = vpop.xlane.xlu0 %1091
        %v1093 = vsel %vm879, %v1023, 0.0
        %1094 = vadd.xlane.f32.xlu0 %v1093
        %v1095 = vpop.xlane.xlu0 %1094
        %v1096 = vsel %vm879, %v1025, 0.0
        %1097 = vadd.xlane.f32.xlu0 %v1096
        %v1098 = vpop.xlane.xlu0 %1097
        %v1099 = vsel %vm879, %v1027, 0.0
        %1100 = vadd.xlane.f32.xlu0 %v1099
        %v1101 = vpop.xlane.xlu0 %1100
        %v1102 = vsel %vm879, %v1029, 0.0
        %1103 = vadd.xlane.f32.xlu0 %v1102
        %v1104 = vpop.xlane.xlu0 %1103
        %v1105 = vsel %vm879, %v1031, 0.0
        %1106 = vadd.xlane.f32.xlu0 %v1105
        %v1107 = vpop.xlane.xlu0 %1106
        %v1108 = vsel %vm879, %v1033, 0.0
        %1109 = vadd.xlane.f32.xlu0 %v1108
        %v1110 = vpop.xlane.xlu0 %1109
        %v1111 = vsel %vm879, %v1035, 0.0
        %1112 = vadd.xlane.f32.xlu0 %v1111
        %v1113 = vpop.xlane.xlu0 %1112
        %v1114 = vsel %vm879, %v1037, 0.0
        %1115 = vadd.xlane.f32.xlu0 %v1114
        %v1116 = vpop.xlane.xlu0 %1115
        %v1117 = vsel %vm879, %v1039, 0.0
        %1118 = vadd.xlane.f32.xlu0 %v1117
        %v1119 = vpop.xlane.xlu0 %1118
        %v1120 = vsel %vm879, %v1041, 0.0
        %1121 = vadd.xlane.f32.xlu0 %v1120
        %v1122 = vpop.xlane.xlu0 %1121
        %v1123 = vsel %vm879, %v1043, 0.0
        %1124 = vadd.xlane.f32.xlu0 %v1123
        %v1125 = vpop.xlane.xlu0 %1124
        %v1126 = vsel %vm879, %v1045, 0.0
        %1127 = vadd.xlane.f32.xlu0 %v1126
        %v1128 = vpop.xlane.xlu0 %1127
        %v1129 = vsel %vm879, %v1047, 0.0
        %1130 = vadd.xlane.f32.xlu0 %v1129
        %v1131 = vpop.xlane.xlu0 %1130
        %v1132 = vsel %vm879, %v1049, 0.0
        %1133 = vadd.xlane.f32.xlu0 %v1132
        %v1134 = vpop.xlane.xlu0 %1133
        %v1135 = vsel %vm879, %v1051, 0.0
        %1136 = vadd.xlane.f32.xlu0 %v1135
        %v1137 = vpop.xlane.xlu0 %1136
        %v1138 = vsel %vm879, %v1053, 0.0
        %1139 = vadd.xlane.f32.xlu0 %v1138
        %v1140 = vpop.xlane.xlu0 %1139
        %v1141 = vsel %vm879, %v1055, 0.0
        %1142 = vadd.xlane.f32.xlu0 %v1141
        %v1143 = vpop.xlane.xlu0 %1142
        %v1144 = vsel %vm879, %v1057, 0.0
        %1145 = vadd.xlane.f32.xlu0 %v1144
        %v1146 = vpop.xlane.xlu0 %1145
        %v1147 = vsel %vm879, %v1059, 0.0
        %1148 = vadd.xlane.f32.xlu0 %v1147
        %v1149 = vpop.xlane.xlu0 %1148
        %v1150 = vsel %vm879, %v1061, 0.0
        %1151 = vadd.xlane.f32.xlu0 %v1150
        %v1152 = vpop.xlane.xlu0 %1151
        %v1153 = vsel %vm879, %v1063, 0.0
        %1154 = vadd.xlane.f32.xlu0 %v1153
        %v1155 = vpop.xlane.xlu0 %1154
        %v1156 = vsel %vm879, %v1065, 0.0
        %1157 = vadd.xlane.f32.xlu0 %v1156
        %v1158 = vpop.xlane.xlu0 %1157
        %v1159 = vsel %vm879, %v1067, 0.0
        %1160 = vadd.xlane.f32.xlu0 %v1159
        %v1161 = vpop.xlane.xlu0 %1160
        %v1162 = vsel %vm879, %v1069, 0.0
        %1163 = vadd.xlane.f32.xlu0 %v1162
        %v1164 = vpop.xlane.xlu0 %1163
        %v1165 = vsel %vm879, %v1071, 0.0
        %1166 = vadd.xlane.f32.xlu0 %v1165
        %v1167 = vpop.xlane.xlu0 %1166
        %v1168 = vrcp.pop %v1074
        %v1169 = vrcp.pop %v1077
        %v1170 = vrcp.pop %v1080
        %v1171 = vrcp.pop %v1083
        %v1172 = vrcp.pop %v1086
        %v1173 = vrcp.pop %v1089
        %v1174 = vrcp.pop %v1092
        %v1175 = vrcp.pop %v1095
        %v1176 = vrcp.pop %v1098
        %v1177 = vrcp.pop %v1101
        %v1178 = vrcp.pop %v1104
        %v1179 = vrcp.pop %v1107
        %v1180 = vrcp.pop %v1110
        %v1181 = vrcp.pop %v1113
        %v1182 = vrcp.pop %v1116
        %v1183 = vrcp.pop %v1119
        %v1184 = vrcp.pop %v1122
        %v1185 = vrcp.pop %v1125
        %v1186 = vrcp.pop %v1128
        %v1187 = vrcp.pop %v1131
        %v1188 = vrcp.pop %v1134
        %v1189 = vrcp.pop %v1137
        %v1190 = vrcp.pop %v1140
        %v1191 = vrcp.pop %v1143
        %v1192 = vrcp.pop %v1146
        %v1193 = vrcp.pop %v1149
        %v1194 = vrcp.pop %v1152
        %v1195 = vrcp.pop %v1155
        %v1196 = vrcp.pop %v1158
        %v1197 = vrcp.pop %v1161
        %v1198 = vrcp.pop %v1164
        %v1199 = vrcp.pop %v1167
        %v1200 = vmul.f32 %v1009, %v1168
        %v1201 = vmul.f32 %v1011, %v1169
        %v1202 = vmul.f32 %v1013, %v1170
        %v1203 = vmul.f32 %v1015, %v1171
        %v1204 = vmul.f32 %v1017, %v1172
        %v1205 = vmul.f32 %v1019, %v1173
        %v1206 = vmul.f32 %v1021, %v1174
        %v1207 = vmul.f32 %v1023, %v1175
        %v1208 = vmul.f32 %v1025, %v1176
        %v1209 = vmul.f32 %v1027, %v1177
        %v1210 = vmul.f32 %v1029, %v1178
        %v1211 = vmul.f32 %v1031, %v1179
        %v1212 = vmul.f32 %v1033, %v1180
        %v1213 = vmul.f32 %v1035, %v1181
        %v1214 = vmul.f32 %v1037, %v1182
        %v1215 = vmul.f32 %v1039, %v1183
        %v1216 = vmul.f32 %v1041, %v1184
        %v1217 = vmul.f32 %v1043, %v1185
        %v1218 = vmul.f32 %v1045, %v1186
        %v1219 = vmul.f32 %v1047, %v1187
        %v1220 = vmul.f32 %v1049, %v1188
        %v1221 = vmul.f32 %v1051, %v1189
        %v1222 = vmul.f32 %v1053, %v1190
        %v1223 = vmul.f32 %v1055, %v1191
        %v1224 = vmul.f32 %v1057, %v1192
        %v1225 = vmul.f32 %v1059, %v1193
        %v1226 = vmul.f32 %v1061, %v1194
        %v1227 = vmul.f32 %v1063, %v1195
        %v1228 = vmul.f32 %v1065, %v1196
        %v1229 = vmul.f32 %v1067, %v1197
        %v1230 = vmul.f32 %v1069, %v1198
        %v1231 = vmul.f32 %v1071, %v1199
        %v1232 = vpack.c.bf16 %v1201, %v1200
        %v1233 = vpack.c.bf16 %v1203, %v1202
        %v1234 = vpack.c.bf16 %v1205, %v1204
        %v1235 = vpack.c.bf16 %v1207, %v1206
        %v1236 = vpack.c.bf16 %v1209, %v1208
        %v1237 = vpack.c.bf16 %v1211, %v1210
        %v1238 = vpack.c.bf16 %v1213, %v1212
        %v1239 = vpack.c.bf16 %v1215, %v1214
        %v1240 = vpack.c.bf16 %v1217, %v1216
        %v1241 = vpack.c.bf16 %v1219, %v1218
        %v1242 = vpack.c.bf16 %v1221, %v1220
        %v1243 = vpack.c.bf16 %v1223, %v1222
        %v1244 = vpack.c.bf16 %v1225, %v1224
        %v1245 = vpack.c.bf16 %v1227, %v1226
        %v1246 = vpack.c.bf16 %v1229, %v1228
        %v1247 = vpack.c.bf16 %v1231, %v1230
        %v1248 = vld [vmem:[%s355] sm:$0xf]
        %v1249 = vld [vmem:[%s355 + $0x4] sm:$0xf]
        %v1250 = vld [vmem:[%s355 + $0x8] sm:$0xf]
        %v1251 = vld [vmem:[%s355 + $0xc] sm:$0xf]
        %v1252 = vld [vmem:[%s355 + $0x10] sm:$0xf]
        %v1253 = vld [vmem:[%s355 + $0x14] sm:$0xf]
        %v1254 = vld [vmem:[%s355 + $0x18] sm:$0xf]
        %v1255 = vld [vmem:[%s355 + $0x1c] sm:$0xf]
        %v1264 = vunpack.c.l.b16 %v1248
        %v1265 = vunpack.c.l.b16 %v1249
        %v1266 = vunpack.c.l.b16 %v1250
        %v1267 = vunpack.c.l.b16 %v1251
        %v1268 = vunpack.c.l.b16 %v1252
        %v1269 = vunpack.c.l.b16 %v1253
        %v1270 = vunpack.c.l.b16 %v1254
        %v1271 = vunpack.c.l.b16 %v1255
        %v1272 = vpack.c.b16 %v1265, %v1264
        %v1273 = vpack.c.b16 %v1267, %v1266
        %v1274 = vpack.c.b16 %v1269, %v1268
        %v1275 = vpack.c.b16 %v1271, %v1270
        %v1281 = vsel %vm879, %v1232, 0
        %v1284 = vsel %vm879, %v1233, 0
        %v1287 = vsel %vm879, %v1234, 0
        %v1290 = vsel %vm879, %v1235, 0
        %v1293 = vsel %vm879, %v1236, 0
        %v1296 = vsel %vm879, %v1237, 0
        %v1299 = vsel %vm879, %v1238, 0
        %v1302 = vsel %vm879, %v1239, 0
        %v1305 = vsel %vm879, %v1240, 0
        %v1308 = vsel %vm879, %v1241, 0
        %v1311 = vsel %vm879, %v1242, 0
        %v1314 = vsel %vm879, %v1243, 0
        %v1317 = vsel %vm879, %v1244, 0
        %v1320 = vsel %vm879, %v1245, 0
        %v1323 = vsel %vm879, %v1246, 0
        %v1326 = vsel %vm879, %v1247, 0
        %1328 = vmatprep.subr.bf16.mxu0 0
        %1329 = vmatpush1.bf16.msra.mxu0 0
        %1330 = vmatprep.subr.bf16.mxu0 0
        %1331 = vmatpush1.bf16.msra.mxu0 0
        %1332 = vmatprep.subr.bf16.mxu0 0
        %1333 = vmatpush1.bf16.msra.mxu0 0
        %1334 = vmatprep.subr.bf16.mxu0 0
        %1335 = vmatpush1.bf16.msra.mxu0 0
        %1336 = vmatprep.subr.bf16.mxu0 0
        %1337 = vmatpush1.bf16.msra.mxu0 %v1275
        %1338 = vmatprep.subr.bf16.mxu0 0
        %1339 = vmatpush1.bf16.msra.mxu0 %v1274
        %1340 = vmatprep.subr.bf16.mxu0 0
        %1341 = vmatpush1.bf16.msra.mxu0 %v1273
        %1342 = vmatprep.subr.bf16.mxu0 0
        %1343 = vmatpush1.bf16.msra.mxu0 %v1272
        %1344 = vmatprep.subr.bf16.mxu0 0
        %1345 = vmatpush2.bf16.msra.mxu0 0
        %1346 = vmatprep.subr.bf16.mxu0 0
        %1347 = vmatpush2.bf16.msra.mxu0 0
        %1348 = vmatprep.subr.bf16.mxu0 0
        %1349 = vmatpush2.bf16.msra.mxu0 0
        %1350 = vmatprep.subr.bf16.mxu0 0
        %1351 = vmatpush2.bf16.msra.mxu0 0
        %1352 = vmatprep.subr.bf16.mxu0 0
        %1353 = vmatpush2.bf16.msra.mxu0 0
        %1354 = vmatprep.subr.bf16.mxu0 0
        %1355 = vmatpush2.bf16.msra.mxu0 0
        %1356 = vmatprep.subr.bf16.mxu0 0
        %1357 = vmatpush2.bf16.msra.mxu0 0
        %1358 = vmatprep.subr.bf16.mxu0 0
        %1359 = vmatpush2.bf16.msra.mxu0 0
        %1360 = vmatprep.mubr.bf16.mxu0 0
        %1361 = vmatmul.mubr.bf16.gmra.mxu0 %v1281
        %v1362 = vpop.f32.mrf.mxu0
        %v1363 = vadd.f32 0.0, %v1362
        %v1364 = vpop.f32.mrf.mxu0
        %v1365 = vpop.f32.mrf.mxu0
        %v1366 = vadd.f32 0.0, %v1365
        %v1367 = vpop.f32.mrf.mxu0
        %1368 = vmatprep.mubr.bf16.mxu0 0
        %1369 = vmatmul.mubr.bf16.gmra.mxu0 %v1284
        %v1370 = vpop.f32.mrf.mxu0
        %v1371 = vadd.f32 0.0, %v1370
        %v1372 = vpop.f32.mrf.mxu0
        %v1373 = vpop.f32.mrf.mxu0
        %v1374 = vadd.f32 0.0, %v1373
        %v1375 = vpop.f32.mrf.mxu0
        %1376 = vmatprep.mubr.bf16.mxu0 0
        %1377 = vmatmul.mubr.bf16.gmra.mxu0 %v1287
        %v1378 = vpop.f32.mrf.mxu0
        %v1379 = vadd.f32 0.0, %v1378
        %v1380 = vpop.f32.mrf.mxu0
        %v1381 = vpop.f32.mrf.mxu0
        %v1382 = vadd.f32 0.0, %v1381
        %v1383 = vpop.f32.mrf.mxu0
        %1384 = vmatprep.mubr.bf16.mxu0 0
        %1385 = vmatmul.mubr.bf16.gmra.mxu0 %v1290
        %v1386 = vpop.f32.mrf.mxu0
        %v1387 = vadd.f32 0.0, %v1386
        %v1388 = vpop.f32.mrf.mxu0
        %v1389 = vpop.f32.mrf.mxu0
        %v1390 = vadd.f32 0.0, %v1389
        %v1391 = vpop.f32.mrf.mxu0
        %1392 = vmatprep.mubr.bf16.mxu0 0
        %1393 = vmatmul.mubr.bf16.gmra.mxu0 %v1293
        %v1394 = vpop.f32.mrf.mxu0
        %v1395 = vadd.f32 0.0, %v1394
        %v1396 = vpop.f32.mrf.mxu0
        %v1397 = vpop.f32.mrf.mxu0
        %v1398 = vadd.f32 0.0, %v1397
        %v1399 = vpop.f32.mrf.mxu0
        %1400 = vmatprep.mubr.bf16.mxu0 0
        %1401 = vmatmul.mubr.bf16.gmra.mxu0 %v1296
        %v1402 = vpop.f32.mrf.mxu0
        %v1403 = vadd.f32 0.0, %v1402
        %v1404 = vpop.f32.mrf.mxu0
        %v1405 = vpop.f32.mrf.mxu0
        %v1406 = vadd.f32 0.0, %v1405
        %v1407 = vpop.f32.mrf.mxu0
        %1408 = vmatprep.mubr.bf16.mxu0 0
        %1409 = vmatmul.mubr.bf16.gmra.mxu0 %v1299
        %v1410 = vpop.f32.mrf.mxu0
        %v1411 = vadd.f32 0.0, %v1410
        %v1412 = vpop.f32.mrf.mxu0
        %v1413 = vpop.f32.mrf.mxu0
        %v1414 = vadd.f32 0.0, %v1413
        %v1415 = vpop.f32.mrf.mxu0
        %1416 = vmatprep.mubr.bf16.mxu0 0
        %1417 = vmatmul.mubr.bf16.gmra.mxu0 %v1302
        %v1418 = vpop.f32.mrf.mxu0
        %v1419 = vadd.f32 0.0, %v1418
        %v1420 = vpop.f32.mrf.mxu0
        %v1421 = vpop.f32.mrf.mxu0
        %v1422 = vadd.f32 0.0, %v1421
        %v1423 = vpop.f32.mrf.mxu0
        %1424 = vmatprep.mubr.bf16.mxu0 0
        %1425 = vmatmul.mubr.bf16.gmra.mxu0 %v1305
        %v1426 = vpop.f32.mrf.mxu0
        %v1427 = vadd.f32 0.0, %v1426
        %v1428 = vpop.f32.mrf.mxu0
        %v1429 = vpop.f32.mrf.mxu0
        %v1430 = vadd.f32 0.0, %v1429
        %v1431 = vpop.f32.mrf.mxu0
        %1432 = vmatprep.mubr.bf16.mxu0 0
        %1433 = vmatmul.mubr.bf16.gmra.mxu0 %v1308
        %v1434 = vpop.f32.mrf.mxu0
        %v1435 = vadd.f32 0.0, %v1434
        %v1436 = vpop.f32.mrf.mxu0
        %v1437 = vpop.f32.mrf.mxu0
        %v1438 = vadd.f32 0.0, %v1437
        %v1439 = vpop.f32.mrf.mxu0
        %1440 = vmatprep.mubr.bf16.mxu0 0
        %1441 = vmatmul.mubr.bf16.gmra.mxu0 %v1311
        %v1442 = vpop.f32.mrf.mxu0
        %v1443 = vadd.f32 0.0, %v1442
        %v1444 = vpop.f32.mrf.mxu0
        %v1445 = vpop.f32.mrf.mxu0
        %v1446 = vadd.f32 0.0, %v1445
        %v1447 = vpop.f32.mrf.mxu0
        %1448 = vmatprep.mubr.bf16.mxu0 0
        %1449 = vmatmul.mubr.bf16.gmra.mxu0 %v1314
        %v1450 = vpop.f32.mrf.mxu0
        %v1451 = vadd.f32 0.0, %v1450
        %v1452 = vpop.f32.mrf.mxu0
        %v1453 = vpop.f32.mrf.mxu0
        %v1454 = vadd.f32 0.0, %v1453
        %v1455 = vpop.f32.mrf.mxu0
        %1456 = vmatprep.mubr.bf16.mxu0 0
        %1457 = vmatmul.mubr.bf16.gmra.mxu0 %v1317
        %v1458 = vpop.f32.mrf.mxu0
        %v1459 = vadd.f32 0.0, %v1458
        %v1460 = vpop.f32.mrf.mxu0
        %v1461 = vpop.f32.mrf.mxu0
        %v1462 = vadd.f32 0.0, %v1461
        %v1463 = vpop.f32.mrf.mxu0
        %1464 = vmatprep.mubr.bf16.mxu0 0
        %1465 = vmatmul.mubr.bf16.gmra.mxu0 %v1320
        %v1466 = vpop.f32.mrf.mxu0
        %v1467 = vadd.f32 0.0, %v1466
        %v1468 = vpop.f32.mrf.mxu0
        %v1469 = vpop.f32.mrf.mxu0
        %v1470 = vadd.f32 0.0, %v1469
        %v1471 = vpop.f32.mrf.mxu0
        %1472 = vmatprep.mubr.bf16.mxu0 0
        %1473 = vmatmul.mubr.bf16.gmra.mxu0 %v1323
        %v1474 = vpop.f32.mrf.mxu0
        %v1475 = vadd.f32 0.0, %v1474
        %v1476 = vpop.f32.mrf.mxu0
        %v1477 = vpop.f32.mrf.mxu0
        %v1478 = vadd.f32 0.0, %v1477
        %v1479 = vpop.f32.mrf.mxu0
        %1480 = vmatprep.mubr.bf16.mxu0 0
        %1481 = vmatmul.mubr.bf16.gmra.mxu0 %v1326
        %v1482 = vpop.f32.mrf.mxu0
        %v1483 = vadd.f32 0.0, %v1482
        %v1484 = vpop.f32.mrf.mxu0
        %v1485 = vpop.f32.mrf.mxu0
        %v1486 = vadd.f32 0.0, %v1485
        %v1487 = vpop.f32.mrf.mxu0
        %1488 = vdwg.mxu0
        %v1489 = vpack.c.bf16 %v1366, %v1363
        %v1490 = vpack.c.bf16 %v1374, %v1371
        %v1491 = vpack.c.bf16 %v1382, %v1379
        %v1492 = vpack.c.bf16 %v1390, %v1387
        %v1493 = vpack.c.bf16 %v1398, %v1395
        %v1494 = vpack.c.bf16 %v1406, %v1403
        %v1495 = vpack.c.bf16 %v1414, %v1411
        %v1496 = vpack.c.bf16 %v1422, %v1419
        %v1497 = vpack.c.bf16 %v1430, %v1427
        %v1498 = vpack.c.bf16 %v1438, %v1435
        %v1499 = vpack.c.bf16 %v1446, %v1443
        %v1500 = vpack.c.bf16 %v1454, %v1451
        %v1501 = vpack.c.bf16 %v1462, %v1459
        %v1502 = vpack.c.bf16 %v1470, %v1467
        %v1503 = vpack.c.bf16 %v1478, %v1475
        %v1504 = vpack.c.bf16 %v1486, %v1483
        %v1505 = vld [vmem:[%s5] sm:$0xf]
        %v1506 = vld [vmem:[%s5 + $0x4] sm:$0xf]
        %v1507 = vld [vmem:[%s5 + $0x8] sm:$0xf]
        %v1508 = vld [vmem:[%s5 + $0xc] sm:$0xf]
        %v1509 = vld [vmem:[%s5 + $0x10] sm:$0xf]
        %v1510 = vld [vmem:[%s5 + $0x14] sm:$0xf]
        %v1511 = vld [vmem:[%s5 + $0x18] sm:$0xf]
        %v1512 = vld [vmem:[%s5 + $0x1c] sm:$0xf]
        %v1513 = vld [vmem:[%s5 + $0x20] sm:$0xf]
        %v1514 = vld [vmem:[%s5 + $0x24] sm:$0xf]
        %v1515 = vld [vmem:[%s5 + $0x28] sm:$0xf]
        %v1516 = vld [vmem:[%s5 + $0x2c] sm:$0xf]
        %v1517 = vld [vmem:[%s5 + $0x30] sm:$0xf]
        %v1518 = vld [vmem:[%s5 + $0x34] sm:$0xf]
        %v1519 = vld [vmem:[%s5 + $0x38] sm:$0xf]
        %v1520 = vld [vmem:[%s5 + $0x3c] sm:$0xf]
        %v1521 = vld [vmem:[%s6] sm:$0x1]
        %v1523 = vlaneseq
        %v1524 = vshrl.u32 %v1523, 7
        %v1525 = vsub.s32 0, %v1524
        %v1526 = vrot.slane %v1521, %v1525
        %v1544 = vunpack.c.l.b16 %v1505
        %v1545 = vunpack.c.l.b16 %v1506
        %v1546 = vunpack.c.l.b16 %v1507
        %v1547 = vunpack.c.l.b16 %v1508
        %v1548 = vunpack.c.l.b16 %v1509
        %v1549 = vunpack.c.l.b16 %v1510
        %v1550 = vunpack.c.l.b16 %v1511
        %v1551 = vunpack.c.l.b16 %v1512
        %v1552 = vunpack.c.l.b16 %v1513
        %v1553 = vunpack.c.l.b16 %v1514
        %v1554 = vunpack.c.l.b16 %v1515
        %v1555 = vunpack.c.l.b16 %v1516
        %v1556 = vunpack.c.l.b16 %v1517
        %v1557 = vunpack.c.l.b16 %v1518
        %v1558 = vunpack.c.l.b16 %v1519
        %v1559 = vunpack.c.l.b16 %v1520
        %v1560 = vpack.c.b16 %v1545, %v1544
        %v1561 = vpack.c.b16 %v1547, %v1546
        %v1562 = vpack.c.b16 %v1549, %v1548
        %v1563 = vpack.c.b16 %v1551, %v1550
        %v1564 = vpack.c.b16 %v1553, %v1552
        %v1565 = vpack.c.b16 %v1555, %v1554
        %v1566 = vpack.c.b16 %v1557, %v1556
        %v1567 = vpack.c.b16 %v1559, %v1558
        %1576 = vmatprep.subr.bf16.mxu0 0
        %1577 = vmatpush1.bf16.msra.mxu0 %v1567
        %1578 = vmatprep.subr.bf16.mxu0 0
        %1579 = vmatpush1.bf16.msra.mxu0 %v1566
        %1580 = vmatprep.subr.bf16.mxu0 0
        %1581 = vmatpush1.bf16.msra.mxu0 %v1565
        %1582 = vmatprep.subr.bf16.mxu0 0
        %1583 = vmatpush1.bf16.msra.mxu0 %v1564
        %1584 = vmatprep.subr.bf16.mxu0 0
        %1585 = vmatpush1.bf16.msra.mxu0 %v1563
        %1586 = vmatprep.subr.bf16.mxu0 0
        %1587 = vmatpush1.bf16.msra.mxu0 %v1562
        %1588 = vmatprep.subr.bf16.mxu0 0
        %1589 = vmatpush1.bf16.msra.mxu0 %v1561
        %1590 = vmatprep.subr.bf16.mxu0 0
        %1591 = vmatpush1.bf16.msra.mxu0 %v1560
        %1592 = vmatprep.subr.bf16.mxu0 0
        %1593 = vmatpush2.bf16.msra.mxu0 0
        %1594 = vmatprep.subr.bf16.mxu0 0
        %1595 = vmatpush2.bf16.msra.mxu0 0
        %1596 = vmatprep.subr.bf16.mxu0 0
        %1597 = vmatpush2.bf16.msra.mxu0 0
        %1598 = vmatprep.subr.bf16.mxu0 0
        %1599 = vmatpush2.bf16.msra.mxu0 0
        %1600 = vmatprep.subr.bf16.mxu0 0
        %1601 = vmatpush2.bf16.msra.mxu0 0
        %1602 = vmatprep.subr.bf16.mxu0 0
        %1603 = vmatpush2.bf16.msra.mxu0 0
        %1604 = vmatprep.subr.bf16.mxu0 0
        %1605 = vmatpush2.bf16.msra.mxu0 0
        %1606 = vmatprep.subr.bf16.mxu0 0
        %1607 = vmatpush2.bf16.msra.mxu0 0
        %1608 = vmatprep.mubr.bf16.mxu0 0
        %1609 = vmatmul.mubr.bf16.gmra.mxu0 %v1489
        %v1610 = vpop.f32.mrf.mxu0
        %v1611 = vadd.f32 %v1526, %v1610
        %v1612 = vpop.f32.mrf.mxu0
        %v1613 = vpop.f32.mrf.mxu0
        %v1614 = vadd.f32 %v1526, %v1613
        %v1615 = vpop.f32.mrf.mxu0
        %1616 = vmatprep.mubr.bf16.mxu0 0
        %1617 = vmatmul.mubr.bf16.gmra.mxu0 %v1490
        %v1618 = vpop.f32.mrf.mxu0
        %v1619 = vadd.f32 %v1526, %v1618
        %v1620 = vpop.f32.mrf.mxu0
        %v1621 = vpop.f32.mrf.mxu0
        %v1622 = vadd.f32 %v1526, %v1621
        %v1623 = vpop.f32.mrf.mxu0
        %1624 = vmatprep.mubr.bf16.mxu0 0
        %1625 = vmatmul.mubr.bf16.gmra.mxu0 %v1491
        %v1626 = vpop.f32.mrf.mxu0
        %v1627 = vadd.f32 %v1526, %v1626
        %v1628 = vpop.f32.mrf.mxu0
        %v1629 = vpop.f32.mrf.mxu0
        %v1630 = vadd.f32 %v1526, %v1629
        %v1631 = vpop.f32.mrf.mxu0
        %1632 = vmatprep.mubr.bf16.mxu0 0
        %1633 = vmatmul.mubr.bf16.gmra.mxu0 %v1492
        %v1634 = vpop.f32.mrf.mxu0
        %v1635 = vadd.f32 %v1526, %v1634
        %v1636 = vpop.f32.mrf.mxu0
        %v1637 = vpop.f32.mrf.mxu0
        %v1638 = vadd.f32 %v1526, %v1637
        %v1639 = vpop.f32.mrf.mxu0
        %1640 = vmatprep.mubr.bf16.mxu0 0
        %1641 = vmatmul.mubr.bf16.gmra.mxu0 %v1493
        %v1642 = vpop.f32.mrf.mxu0
        %v1643 = vadd.f32 %v1526, %v1642
        %v1644 = vpop.f32.mrf.mxu0
        %v1645 = vpop.f32.mrf.mxu0
        %v1646 = vadd.f32 %v1526, %v1645
        %v1647 = vpop.f32.mrf.mxu0
        %1648 = vmatprep.mubr.bf16.mxu0 0
        %1649 = vmatmul.mubr.bf16.gmra.mxu0 %v1494
        %v1650 = vpop.f32.mrf.mxu0
        %v1651 = vadd.f32 %v1526, %v1650
        %v1652 = vpop.f32.mrf.mxu0
        %v1653 = vpop.f32.mrf.mxu0
        %v1654 = vadd.f32 %v1526, %v1653
        %v1655 = vpop.f32.mrf.mxu0
        %1656 = vmatprep.mubr.bf16.mxu0 0
        %1657 = vmatmul.mubr.bf16.gmra.mxu0 %v1495
        %v1658 = vpop.f32.mrf.mxu0
        %v1659 = vadd.f32 %v1526, %v1658
        %v1660 = vpop.f32.mrf.mxu0
        %v1661 = vpop.f32.mrf.mxu0
        %v1662 = vadd.f32 %v1526, %v1661
        %v1663 = vpop.f32.mrf.mxu0
        %1664 = vmatprep.mubr.bf16.mxu0 0
        %1665 = vmatmul.mubr.bf16.gmra.mxu0 %v1496
        %v1666 = vpop.f32.mrf.mxu0
        %v1667 = vadd.f32 %v1526, %v1666
        %v1668 = vpop.f32.mrf.mxu0
        %v1669 = vpop.f32.mrf.mxu0
        %v1670 = vadd.f32 %v1526, %v1669
        %v1671 = vpop.f32.mrf.mxu0
        %1672 = vmatprep.mubr.bf16.mxu0 0
        %1673 = vmatmul.mubr.bf16.gmra.mxu0 %v1497
        %v1674 = vpop.f32.mrf.mxu0
        %v1675 = vadd.f32 %v1526, %v1674
        %v1676 = vpop.f32.mrf.mxu0
        %v1677 = vpop.f32.mrf.mxu0
        %v1678 = vadd.f32 %v1526, %v1677
        %v1679 = vpop.f32.mrf.mxu0
        %1680 = vmatprep.mubr.bf16.mxu0 0
        %1681 = vmatmul.mubr.bf16.gmra.mxu0 %v1498
        %v1682 = vpop.f32.mrf.mxu0
        %v1683 = vadd.f32 %v1526, %v1682
        %v1684 = vpop.f32.mrf.mxu0
        %v1685 = vpop.f32.mrf.mxu0
        %v1686 = vadd.f32 %v1526, %v1685
        %v1687 = vpop.f32.mrf.mxu0
        %1688 = vmatprep.mubr.bf16.mxu0 0
        %1689 = vmatmul.mubr.bf16.gmra.mxu0 %v1499
        %v1690 = vpop.f32.mrf.mxu0
        %v1691 = vadd.f32 %v1526, %v1690
        %v1692 = vpop.f32.mrf.mxu0
        %v1693 = vpop.f32.mrf.mxu0
        %v1694 = vadd.f32 %v1526, %v1693
        %v1695 = vpop.f32.mrf.mxu0
        %1696 = vmatprep.mubr.bf16.mxu0 0
        %1697 = vmatmul.mubr.bf16.gmra.mxu0 %v1500
        %v1698 = vpop.f32.mrf.mxu0
        %v1699 = vadd.f32 %v1526, %v1698
        %v1700 = vpop.f32.mrf.mxu0
        %v1701 = vpop.f32.mrf.mxu0
        %v1702 = vadd.f32 %v1526, %v1701
        %v1703 = vpop.f32.mrf.mxu0
        %1704 = vmatprep.mubr.bf16.mxu0 0
        %1705 = vmatmul.mubr.bf16.gmra.mxu0 %v1501
        %v1706 = vpop.f32.mrf.mxu0
        %v1707 = vadd.f32 %v1526, %v1706
        %v1708 = vpop.f32.mrf.mxu0
        %v1709 = vpop.f32.mrf.mxu0
        %v1710 = vadd.f32 %v1526, %v1709
        %v1711 = vpop.f32.mrf.mxu0
        %1712 = vmatprep.mubr.bf16.mxu0 0
        %1713 = vmatmul.mubr.bf16.gmra.mxu0 %v1502
        %v1714 = vpop.f32.mrf.mxu0
        %v1715 = vadd.f32 %v1526, %v1714
        %v1716 = vpop.f32.mrf.mxu0
        %v1717 = vpop.f32.mrf.mxu0
        %v1718 = vadd.f32 %v1526, %v1717
        %v1719 = vpop.f32.mrf.mxu0
        %1720 = vmatprep.mubr.bf16.mxu0 0
        %1721 = vmatmul.mubr.bf16.gmra.mxu0 %v1503
        %v1722 = vpop.f32.mrf.mxu0
        %v1723 = vadd.f32 %v1526, %v1722
        %v1724 = vpop.f32.mrf.mxu0
        %v1725 = vpop.f32.mrf.mxu0
        %v1726 = vadd.f32 %v1526, %v1725
        %v1727 = vpop.f32.mrf.mxu0
        %1728 = vmatprep.mubr.bf16.mxu0 0
        %1729 = vmatmul.mubr.bf16.gmra.mxu0 %v1504
        %v1730 = vpop.f32.mrf.mxu0
        %v1731 = vadd.f32 %v1526, %v1730
        %v1732 = vpop.f32.mrf.mxu0
        %v1733 = vpop.f32.mrf.mxu0
        %v1734 = vadd.f32 %v1526, %v1733
        %v1735 = vpop.f32.mrf.mxu0
        %1736 = vdwg.mxu0
        %v1737 = vadd.f32 %v1611, %v358
        %v1738 = vadd.f32 %v1614, %v359
        %v1739 = vadd.f32 %v1619, %v360
        %v1740 = vadd.f32 %v1622, %v361
        %v1741 = vadd.f32 %v1627, %v362
        %v1742 = vadd.f32 %v1630, %v363
        %v1743 = vadd.f32 %v1635, %v364
        %v1744 = vadd.f32 %v1638, %v365
        %v1745 = vadd.f32 %v1643, %v366
        %v1746 = vadd.f32 %v1646, %v367
        %v1747 = vadd.f32 %v1651, %v368
        %v1748 = vadd.f32 %v1654, %v369
        %v1749 = vadd.f32 %v1659, %v370
        %v1750 = vadd.f32 %v1662, %v371
        %v1751 = vadd.f32 %v1667, %v372
        %v1752 = vadd.f32 %v1670, %v373
        %v1753 = vadd.f32 %v1675, %v374
        %v1754 = vadd.f32 %v1678, %v375
        %v1755 = vadd.f32 %v1683, %v376
        %v1756 = vadd.f32 %v1686, %v377
        %v1757 = vadd.f32 %v1691, %v378
        %v1758 = vadd.f32 %v1694, %v379
        %v1759 = vadd.f32 %v1699, %v380
        %v1760 = vadd.f32 %v1702, %v381
        %v1761 = vadd.f32 %v1707, %v382
        %v1762 = vadd.f32 %v1710, %v383
        %v1763 = vadd.f32 %v1715, %v384
        %v1764 = vadd.f32 %v1718, %v385
        %v1765 = vadd.f32 %v1723, %v386
        %v1766 = vadd.f32 %v1726, %v387
        %v1767 = vadd.f32 %v1731, %v388
        %v1768 = vadd.f32 %v1734, %v389
        %1769 = vst [vmem:[%s344] sm:$0xff] %v1737
        %1770 = vst [vmem:[%s344 + $0x8] sm:$0xff] %v1738
        %1771 = vst [vmem:[%s344 + $0x10] sm:$0xff] %v1739
        %1772 = vst [vmem:[%s344 + $0x18] sm:$0xff] %v1740
        %1773 = vst [vmem:[%s344 + $0x20] sm:$0xff] %v1741
        %1774 = vst [vmem:[%s344 + $0x28] sm:$0xff] %v1742
        %1775 = vst [vmem:[%s344 + $0x30] sm:$0xff] %v1743
        %1776 = vst [vmem:[%s344 + $0x38] sm:$0xff] %v1744
        %1777 = vst [vmem:[%s344 + $0x40] sm:$0xff] %v1745
        %1778 = vst [vmem:[%s344 + $0x48] sm:$0xff] %v1746
        %1779 = vst [vmem:[%s344 + $0x50] sm:$0xff] %v1747
        %1780 = vst [vmem:[%s344 + $0x58] sm:$0xff] %v1748
        %1781 = vst [vmem:[%s344 + $0x60] sm:$0xff] %v1749
        %1782 = vst [vmem:[%s344 + $0x68] sm:$0xff] %v1750
        %1783 = vst [vmem:[%s344 + $0x70] sm:$0xff] %v1751
        %1784 = vst [vmem:[%s344 + $0x78] sm:$0xff] %v1752
        %1785 = vst [vmem:[%s344 + $0x80] sm:$0xff] %v1753
        %1786 = vst [vmem:[%s344 + $0x88] sm:$0xff] %v1754
        %1787 = vst [vmem:[%s344 + $0x90] sm:$0xff] %v1755
        %1788 = vst [vmem:[%s344 + $0x98] sm:$0xff] %v1756
        %1789 = vst [vmem:[%s344 + $0xa0] sm:$0xff] %v1757
        %1790 = vst [vmem:[%s344 + $0xa8] sm:$0xff] %v1758
        %1791 = vst [vmem:[%s344 + $0xb0] sm:$0xff] %v1759
        %1792 = vst [vmem:[%s344 + $0xb8] sm:$0xff] %v1760
        %1793 = vst [vmem:[%s344 + $0xc0] sm:$0xff] %v1761
        %1794 = vst [vmem:[%s344 + $0xc8] sm:$0xff] %v1762
        %1795 = vst [vmem:[%s344 + $0xd0] sm:$0xff] %v1763
        %1796 = vst [vmem:[%s344 + $0xd8] sm:$0xff] %v1764
        %1797 = vst [vmem:[%s344 + $0xe0] sm:$0xff] %v1765
        %1798 = vst [vmem:[%s344 + $0xe8] sm:$0xff] %v1766
        %1799 = vst [vmem:[%s344 + $0xf0] sm:$0xff] %v1767
        %1800 = vst [vmem:[%s344 + $0xf8] sm:$0xff] %v1768
        %s1801 = sand.u32 %s210, 1
        %s1802 = scalar_lea.sflag [#allocation4], %s1801
        %s1803 = sand.u32 %s210, 1
        %s1804 = smul.addr %s1803, 256
        %s1805 = scalar_lea.vmem [#allocation5], %s1804
        // Predicated region
        $region53: #{tpu_custom_call.1} parent=47 // pred_check
          %p1806 = pneg %p220
        $region54: #{tpu_custom_call.1} parent=47 // pred_check_branch
          %1808 = sbr.rel (%p1806) target = $region56
        $region55: #{tpu_custom_call.1} parent=47 // pred_region
          %s1809 = smul.u32 32, %s29
          %s1811 = ssub.s32 4096, 4096
          %1812 = vsyncadd %s1802, %s1811
          %s1813 = smul.addr %s28, 32
          %s1814 = sadd.s32 %s1809, %s1813
          %s1815 = smul.addr %s1814, 128
          %s1816 = scalar_lea.hbm %s7, %s1815
          %s1817 = sshll.u32 %s1805, 4
          %s1818 = int_to_ptr.vmem [resolvable:$true] %s1817
          %1823 = dma.vmem_to_hbm [thread:$0]  %s1818, 4096, %s1816, %s1802, 128, 128, 8
        $region56: #{tpu_custom_call.1} parent=47 // pred_fallthru
          _
      $region48: #{tpu_custom_call.1} parent=5 // pred_fallthru
        _
      %p1824 = scmp.le.s32.totalorder 2, %s19
      // Predicated region
      $region57: #{tpu_custom_call.1} parent=5 // pred_check
        %p1825 = pneg %p1824
      $region58: #{tpu_custom_call.1} parent=5 // pred_check_branch
        %1827 = sbr.rel (%p1825) target = $region60
      $region59: #{tpu_custom_call.1} parent=5 // pred_region
        %s1828 = ssub.s32 %s19, 2
        // Predicated region
        $region61: #{tpu_custom_call.1} parent=59 // pred_check
          %p1829 = pneg %p226
        $region62: #{tpu_custom_call.1} parent=59 // pred_check_branch
          %1831 = sbr.rel (%p1829) target = $region64
        $region63: #{tpu_custom_call.1} parent=59 // pred_region
          %s1832 = sand.u32 %s211, 1
          %s1833 = scalar_lea.sflag [#allocation4], %s1832
          %s1834 = sand.u32 %s211, 1
          %s1835 = smul.addr %s1834, 256
          %s1836 = scalar_lea.vmem [#allocation5], %s1835
          %1837 = dma.done %s1833, 4096
        $region64: #{tpu_custom_call.1} parent=59 // pred_fallthru
          _
      $region60: #{tpu_custom_call.1} parent=5 // pred_fallthru
        _
    $region6: #{tpu_custom_call.1} parent=1 // loop_footer
      %s23 = sadd.s32 1, %s19
    $region7: #{tpu_custom_call.1} parent=1 // loop_footer_branch
      %18 = sbr.rel target = $region3
    $region8: #{tpu_custom_call.1} parent=1 // loop_exit
      _
    %1838 = vsyncpa [#allocation3], 1
    %s1839 = scalar_lea.sflag [#allocation3], 1
    %1840 = vsyncpa %s1839, 1
    %1841 = vsyncpa [#allocation4], 1
    %s1842 = scalar_lea.sflag [#allocation4], 1
    %1843 = vsyncpa %s1842, 1

</llo_original>
